<compile_context>
chip_gen: v7x
topology: tpu7x:2x2x1
jax: 0.10.0
libtpu: 0.0.40
codegen_flags: <defaults>
</compile_context>

<pallas_src>
import functools

import jax
import jax.numpy as jnp
from jax import lax
from jax.experimental import pallas as pl
from jax.experimental.pallas import tpu as pltpu

EPS = 1e-6  # matches the 1e-06 in NMF2D


def hamburger_kernel(x_ref, w_in_ref, b_in_ref, basesT_ref, w_out_ref,
                     b_out_ref, o_ref, e_scr, et_scr, *, steps):
    # ---- ham_in: 1x1 conv (+bias, no norm/act) followed by ReLU -------------
    x_bf = x_ref[...].astype(jnp.bfloat16)                       # (C, N)
    w_in = w_in_ref[...].astype(jnp.bfloat16)                    # (C, C)
    enjoy = jnp.dot(w_in, x_bf, preferred_element_type=jnp.float32)
    enjoy = jnp.maximum(enjoy + b_in_ref[...], 0.0)              # (C, N) f32

    # Stash both layouts of `enjoy` as bf16 in VMEM scratch; the NMF loop
    # reloads them per iteration instead of keeping 64 f32 vregs live.
    e_bf = enjoy.astype(jnp.bfloat16)
    e_scr[...] = e_bf                                            # (C, N) bf16
    et_scr[...] = enjoy.T.astype(jnp.bfloat16)                   # (N, C) bf16

    basesT = basesT_ref[...]                                     # (R, C) f32

    # numT = (x^T @ bases)^T = bases^T @ x ; reused for softmax init AND iter 0
    numT = jnp.dot(basesT.astype(jnp.bfloat16), e_bf,
                   preferred_element_type=jnp.float32)           # (R, N)

    # coef = softmax over R (inv_t == 1 for NMF2D); carried transposed (R, N)
    m = jnp.max(numT, axis=0, keepdims=True)
    p = jnp.exp(numT - m)
    s = jnp.sum(p, axis=0, keepdims=True)
    coefT = p * pl.reciprocal(s, approx=True)                    # (R, N)

    def body(_, carry):
        basesT, coefT, numT = carry
        b_bf = basesT.astype(jnp.bfloat16)

        # ---- coef update:  coef *= (x^T bases) / (coef (bases^T bases) + eps)
        btb = lax.dot_general(b_bf, b_bf, (((1,), (1,)), ((), ())),
                              preferred_element_type=jnp.float32)    # (R, R) symmetric
        denT = jnp.dot(btb.astype(jnp.bfloat16), coefT.astype(jnp.bfloat16),
                       preferred_element_type=jnp.float32)           # (R, N)
        coefT = coefT * numT * pl.reciprocal(denT + EPS, approx=True)
        c_bf = coefT.astype(jnp.bfloat16)

        # ---- bases update: bases *= (x coef) / (bases (coef^T coef) + eps)
        num_b = jnp.dot(c_bf, et_scr[...],
                        preferred_element_type=jnp.float32)          # (R, C)
        ctc = lax.dot_general(c_bf, c_bf, (((1,), (1,)), ((), ())),
                              preferred_element_type=jnp.float32)    # (R, R) symmetric
        den_b = jnp.dot(ctc.astype(jnp.bfloat16), b_bf,
                        preferred_element_type=jnp.float32)          # (R, C)
        basesT = basesT * num_b * pl.reciprocal(den_b + EPS, approx=True)

        # numerator for the NEXT coef update (and for compute_coef after the
        # final iteration) — uses the freshly updated bases.
        numT = jnp.dot(basesT.astype(jnp.bfloat16), e_scr[...],
                       preferred_element_type=jnp.float32)           # (R, N)
        return basesT, coefT, numT

    basesT, coefT, numT = lax.fori_loop(0, steps, body, (basesT, coefT, numT))

    # ---- compute_coef: one final coef update (numT already matches basesT) --
    b_bf = basesT.astype(jnp.bfloat16)
    btb = lax.dot_general(b_bf, b_bf, (((1,), (1,)), ((), ())),
                          preferred_element_type=jnp.float32)
    denT = jnp.dot(btb.astype(jnp.bfloat16), coefT.astype(jnp.bfloat16),
                   preferred_element_type=jnp.float32)
    coefT = coefT * numT * pl.reciprocal(denT + EPS, approx=True)

    # ---- reconstruction: bases @ coef^T  =  basesT^T @ coefT  -> (C, N) -----
    recon = lax.dot_general(b_bf, coefT.astype(jnp.bfloat16),
                            (((0,), (0,)), ((), ())),
                            preferred_element_type=jnp.float32)

    # ---- ham_out: 1x1 conv (+bias; norm_cfg=None -> plain conv, no act) -----
    out = jnp.dot(w_out_ref[...].astype(jnp.bfloat16),
                  recon.astype(jnp.bfloat16),
                  preferred_element_type=jnp.float32) + b_out_ref[...]

    # residual with the ORIGINAL input, then ReLU
    o_ref[...] = jnp.maximum(x_ref[...] + out, 0.0)


def hamburger_forward(x_bchw, w_in, b_in, w_out, b_out, bases, *, steps=6):
    """x_bchw: (B, C, H, W) float32. bases: (B, C, R)  (MD_S == 1, D == C)."""
    B, C, H, W = x_bchw.shape
    N = H * W
    R = bases.shape[-1]
    x = x_bchw.reshape(B, C, N).astype(jnp.float32)
    basesT = jnp.transpose(bases, (0, 2, 1)).astype(jnp.float32)   # (B, R, C)

    kernel = functools.partial(hamburger_kernel, steps=steps)
    out = pl.pallas_call(
        kernel,
        out_shape=jax.ShapeDtypeStruct((B, C, N), jnp.float32),
        grid_spec=pltpu.PrefetchScalarGridSpec(
            num_scalar_prefetch=0,
            grid=(B,),
            in_specs=[
                pl.BlockSpec((None, C, N), lambda b: (b, 0, 0)),   # x
                pl.BlockSpec((C, C), lambda b: (0, 0)),            # w_in
                pl.BlockSpec((C, 1), lambda b: (0, 0)),            # b_in
                pl.BlockSpec((None, R, C), lambda b: (b, 0, 0)),   # bases^T init
                pl.BlockSpec((C, C), lambda b: (0, 0)),            # w_out
                pl.BlockSpec((C, 1), lambda b: (0, 0)),            # b_out
            ],
            out_specs=pl.BlockSpec((None, C, N), lambda b: (b, 0, 0)),
            scratch_shapes=[
                pltpu.VMEM((C, N), jnp.bfloat16),                  # enjoy   (bf16)
                pltpu.VMEM((N, C), jnp.bfloat16),                  # enjoy^T (bf16)
            ],
        ),
        compiler_params=pltpu.CompilerParams(
            dimension_semantics=("parallel",)),
    )(x, w_in, b_in, basesT, w_out, b_out)
    return out.reshape(B, C, H, W)


if __name__ == "__main__":
    # Small, deterministic setup consistent with the module semantics
    # (ham_channels -> C, MD_D == C since SPATIAL=True and MD_S=1, MD_R -> R).
    B, C, H, W = 2, 128, 16, 16
    R = 64
    STEPS = 6  # nn.Module defaults to training mode -> TRAIN_STEPS = 6

    key = jax.random.PRNGKey(0)
    kx, k1, k2, k3, k4, k5 = jax.random.split(key, 6)

    x = jax.random.normal(kx, (B, C, H, W), jnp.float32)

    # 1x1 conv weights / biases (deterministic synthetic init)
    w_in = jax.random.normal(k1, (C, C), jnp.float32) * (1.0 / jnp.sqrt(C))
    b_in = jax.random.normal(k2, (C, 1), jnp.float32) * 0.01
    w_out = jax.random.normal(k3, (C, C), jnp.float32) * (1.0 / jnp.sqrt(C))
    b_out = jax.random.normal(k4, (C, 1), jnp.float32) * 0.01

    # NMF2D rand-init bases: uniform(0,1), L2-normalized over D (== C), per batch
    # (torch.rand(...) + F.normalize(dim=1) reproduced deterministically).
    bases = jax.random.uniform(k5, (B, C, R), jnp.float32)
    bases = bases / jnp.maximum(
        jnp.linalg.norm(bases, axis=1, keepdims=True), 1e-12)

    out = hamburger_forward(x, w_in, b_in, w_out, b_out, bases, steps=STEPS)
    jax.block_until_ready(out)
    assert out.shape == (B, C, H, W)
    print("KERNEL_OK")
</pallas_src>

<mosaic_0001>
module attributes {stable_mosaic.version = 11 : i64} {
  func.func @hamburger_kernel(%arg0: i32, %arg1: memref<1x128x256xf32, #tpu.memory_space<vmem>>, %arg2: memref<128x128xf32, #tpu.memory_space<vmem>>, %arg3: memref<128x1xf32, #tpu.memory_space<vmem>>, %arg4: memref<1x64x128xf32, #tpu.memory_space<vmem>>, %arg5: memref<128x128xf32, #tpu.memory_space<vmem>>, %arg6: memref<128x1xf32, #tpu.memory_space<vmem>>, %arg7: memref<1x128x256xf32, #tpu.memory_space<vmem>>, %arg8: memref<128x256xbf16, #tpu.memory_space<vmem>>, %arg9: memref<256x128xbf16, #tpu.memory_space<vmem>>) attributes {dimension_semantics = [#tpu.dimension_semantics<parallel>], iteration_bounds = array<i64: 2>, scalar_prefetch = 0 : i64, scratch_operands = 2 : i64, tpu.core_type = #tpu.core_type<tc>, window_params = [{transform_indices = @transform_0, window_bounds = array<i64: 1, 128, 256>}, {pipeline_mode = #tpu.pipeline_mode<synchronous>, transform_indices = @transform_1, window_bounds = array<i64: 128, 128>}, {pipeline_mode = #tpu.pipeline_mode<synchronous>, transform_indices = @transform_2, window_bounds = array<i64: 128, 1>}, {transform_indices = @transform_3, window_bounds = array<i64: 1, 64, 128>}, {pipeline_mode = #tpu.pipeline_mode<synchronous>, transform_indices = @transform_4, window_bounds = array<i64: 128, 128>}, {pipeline_mode = #tpu.pipeline_mode<synchronous>, transform_indices = @transform_5, window_bounds = array<i64: 128, 1>}, {transform_indices = @transform_6, window_bounds = array<i64: 1, 128, 256>}]} {
    %c0 = arith.constant 0 : index
    %c0_0 = arith.constant 0 : index
    %c0_1 = arith.constant 0 : index
    %0 = vector.load %arg1[%c0, %c0_0, %c0_1] : memref<1x128x256xf32, #tpu.memory_space<vmem>>, vector<1x128x256xf32>
    %1 = vector.shape_cast %0 : vector<1x128x256xf32> to vector<128x256xf32>
    %2 = arith.truncf %1 : vector<128x256xf32> to vector<128x256xbf16>
    %c0_2 = arith.constant 0 : index
    %c0_3 = arith.constant 0 : index
    %3 = vector.load %arg2[%c0_2, %c0_3] : memref<128x128xf32, #tpu.memory_space<vmem>>, vector<128x128xf32>
    %4 = arith.truncf %3 : vector<128x128xf32> to vector<128x128xbf16>
    %cst = arith.constant dense<0.000000e+00> : vector<128x256xf32>
    %5 = tpu.matmul %4, %2, %cst {dimension_numbers = #tpu.dot_dimension_numbers<[1], [0], [0], [1], [0, 0, 1, 1], [], []>} : vector<128x128xbf16>, vector<128x256xbf16>, vector<128x256xf32> -> vector<128x256xf32>
    %c0_4 = arith.constant 0 : index
    %c0_5 = arith.constant 0 : index
    %6 = vector.load %arg3[%c0_4, %c0_5] : memref<128x1xf32, #tpu.memory_space<vmem>>, vector<128x1xf32>
    %7 = vector.broadcast %6 : vector<128x1xf32> to vector<128x256xf32>
    %8 = arith.addf %5, %7 : vector<128x256xf32>
    %cst_6 = arith.constant 0.000000e+00 : f32
    %9 = vector.broadcast %cst_6 : f32 to vector<128x256xf32>
    %10 = arith.maximumf %8, %9 : vector<128x256xf32>
    %11 = arith.truncf %10 : vector<128x256xf32> to vector<128x256xbf16>
    %c0_7 = arith.constant 0 : index
    %c0_8 = arith.constant 0 : index
    %12 = vector.load %arg8[%c0_7, %c0_8] : memref<128x256xbf16, #tpu.memory_space<vmem>>, vector<128x256xbf16>
    tpu.vector_store %arg8[%c0_7, %c0_8], %11 {strides = array<i32>} : memref<128x256xbf16, #tpu.memory_space<vmem>>, vector<128x256xbf16>,
    %13 = tpu.transpose %10, [1, 0] : vector<128x256xf32> -> vector<256x128xf32>
    %14 = arith.truncf %13 : vector<256x128xf32> to vector<256x128xbf16>
    %c0_9 = arith.constant 0 : index
    %c0_10 = arith.constant 0 : index
    %15 = vector.load %arg9[%c0_9, %c0_10] : memref<256x128xbf16, #tpu.memory_space<vmem>>, vector<256x128xbf16>
    tpu.vector_store %arg9[%c0_9, %c0_10], %14 {strides = array<i32>} : memref<256x128xbf16, #tpu.memory_space<vmem>>, vector<256x128xbf16>,
    %c0_11 = arith.constant 0 : index
    %c0_12 = arith.constant 0 : index
    %c0_13 = arith.constant 0 : index
    %16 = vector.load %arg4[%c0_11, %c0_12, %c0_13] : memref<1x64x128xf32, #tpu.memory_space<vmem>>, vector<1x64x128xf32>
    %17 = vector.shape_cast %16 : vector<1x64x128xf32> to vector<64x128xf32>
    %18 = arith.truncf %17 : vector<64x128xf32> to vector<64x128xbf16>
    %cst_14 = arith.constant dense<0.000000e+00> : vector<64x256xf32>
    %19 = tpu.matmul %18, %11, %cst_14 {dimension_numbers = #tpu.dot_dimension_numbers<[1], [0], [0], [1], [0, 0, 1, 1], [], []>} : vector<64x128xbf16>, vector<128x256xbf16>, vector<64x256xf32> -> vector<64x256xf32>
    %cst_15 = arith.constant dense<0xFF800000> : vector<256xf32>
    %20 = vector.multi_reduction <maximumf>, %19, %cst_15 [0] : vector<64x256xf32> to vector<256xf32>
    %21 = vector.shape_cast %20 : vector<256xf32> to vector<1x256xf32>
    %22 = vector.broadcast %21 : vector<1x256xf32> to vector<64x256xf32>
    %23 = arith.subf %19, %22 : vector<64x256xf32>
    %24 = math.exp %23 : vector<64x256xf32>
    %cst_16 = arith.constant dense<0.000000e+00> : vector<256xf32>
    %25 = vector.multi_reduction <add>, %24, %cst_16 [0] : vector<64x256xf32> to vector<256xf32>
    %26 = vector.shape_cast %25 : vector<256xf32> to vector<1x256xf32>
    %27 = tpu.reciprocal %26 {approx = true} : vector<1x256xf32> -> vector<1x256xf32>
    %28 = vector.broadcast %27 : vector<1x256xf32> to vector<64x256xf32>
    %29 = arith.mulf %24, %28 : vector<64x256xf32>
    %c0_i32 = arith.constant 0 : i32
    %c6_i32 = arith.constant 6 : i32
    %30 = arith.addi %c0_i32, %c6_i32 : i32
    %c1_i32 = arith.constant 1 : i32
    %31:3 = scf.for %arg10 = %c0_i32 to %30 step %c1_i32 iter_args(%arg11 = %17, %arg12 = %29, %arg13 = %19) -> (vector<64x128xf32>, vector<64x256xf32>, vector<64x256xf32>)  : i32 {
      %59 = arith.truncf %arg11 : vector<64x128xf32> to vector<64x128xbf16>
      %cst_33 = arith.constant dense<0.000000e+00> : vector<64x64xf32>
      %60 = tpu.matmul %59, %59, %cst_33 {dimension_numbers = #tpu.dot_dimension_numbers<[1], [1], [0], [0], [0, 0, 1, 0], [], []>} : vector<64x128xbf16>, vector<64x128xbf16>, vector<64x64xf32> -> vector<64x64xf32>
      %61 = arith.truncf %60 : vector<64x64xf32> to vector<64x64xbf16>
      %62 = arith.truncf %arg12 : vector<64x256xf32> to vector<64x256xbf16>
      %cst_34 = arith.constant dense<0.000000e+00> : vector<64x256xf32>
      %63 = tpu.matmul %61, %62, %cst_34 {dimension_numbers = #tpu.dot_dimension_numbers<[1], [0], [0], [1], [0, 0, 1, 1], [], []>} : vector<64x64xbf16>, vector<64x256xbf16>, vector<64x256xf32> -> vector<64x256xf32>
      %64 = arith.mulf %arg12, %arg13 : vector<64x256xf32>
      %cst_35 = arith.constant 9.99999997E-7 : f32
      %65 = vector.broadcast %cst_35 : f32 to vector<64x256xf32>
      %66 = arith.addf %63, %65 : vector<64x256xf32>
      %67 = tpu.reciprocal %66 {approx = true} : vector<64x256xf32> -> vector<64x256xf32>
      %68 = arith.mulf %64, %67 : vector<64x256xf32>
      %69 = arith.truncf %68 : vector<64x256xf32> to vector<64x256xbf16>
      %c0_36 = arith.constant 0 : index
      %c0_37 = arith.constant 0 : index
      %70 = vector.load %arg9[%c0_36, %c0_37] : memref<256x128xbf16, #tpu.memory_space<vmem>>, vector<256x128xbf16>
      %cst_38 = arith.constant dense<0.000000e+00> : vector<64x128xf32>
      %71 = tpu.matmul %69, %70, %cst_38 {dimension_numbers = #tpu.dot_dimension_numbers<[1], [0], [0], [1], [0, 0, 1, 1], [], []>} : vector<64x256xbf16>, vector<256x128xbf16>, vector<64x128xf32> -> vector<64x128xf32>
      %cst_39 = arith.constant dense<0.000000e+00> : vector<64x64xf32>
      %72 = tpu.matmul %69, %69, %cst_39 {dimension_numbers = #tpu.dot_dimension_numbers<[1], [1], [0], [0], [0, 0, 1, 0], [], []>} : vector<64x256xbf16>, vector<64x256xbf16>, vector<64x64xf32> -> vector<64x64xf32>
      %73 = arith.truncf %72 : vector<64x64xf32> to vector<64x64xbf16>
      %cst_40 = arith.constant dense<0.000000e+00> : vector<64x128xf32>
      %74 = tpu.matmul %73, %59, %cst_40 {dimension_numbers = #tpu.dot_dimension_numbers<[1], [0], [0], [1], [0, 0, 1, 1], [], []>} : vector<64x64xbf16>, vector<64x128xbf16>, vector<64x128xf32> -> vector<64x128xf32>
      %75 = arith.mulf %arg11, %71 : vector<64x128xf32>
      %cst_41 = arith.constant 9.99999997E-7 : f32
      %76 = vector.broadcast %cst_41 : f32 to vector<64x128xf32>
      %77 = arith.addf %74, %76 : vector<64x128xf32>
      %78 = tpu.reciprocal %77 {approx = true} : vector<64x128xf32> -> vector<64x128xf32>
      %79 = arith.mulf %75, %78 : vector<64x128xf32>
      %80 = arith.truncf %79 : vector<64x128xf32> to vector<64x128xbf16>
      %c0_42 = arith.constant 0 : index
      %c0_43 = arith.constant 0 : index
      %81 = vector.load %arg8[%c0_42, %c0_43] : memref<128x256xbf16, #tpu.memory_space<vmem>>, vector<128x256xbf16>
      %cst_44 = arith.constant dense<0.000000e+00> : vector<64x256xf32>
      %82 = tpu.matmul %80, %81, %cst_44 {dimension_numbers = #tpu.dot_dimension_numbers<[1], [0], [0], [1], [0, 0, 1, 1], [], []>} : vector<64x128xbf16>, vector<128x256xbf16>, vector<64x256xf32> -> vector<64x256xf32>
      scf.yield %79, %68, %82 : vector<64x128xf32>, vector<64x256xf32>, vector<64x256xf32>
    }
    %32 = arith.truncf %31#0 : vector<64x128xf32> to vector<64x128xbf16>
    %cst_17 = arith.constant dense<0.000000e+00> : vector<64x64xf32>
    %33 = tpu.matmul %32, %32, %cst_17 {dimension_numbers = #tpu.dot_dimension_numbers<[1], [1], [0], [0], [0, 0, 1, 0], [], []>} : vector<64x128xbf16>, vector<64x128xbf16>, vector<64x64xf32> -> vector<64x64xf32>
    %34 = arith.truncf %33 : vector<64x64xf32> to vector<64x64xbf16>
    %35 = arith.truncf %31#1 : vector<64x256xf32> to vector<64x256xbf16>
    %cst_18 = arith.constant dense<0.000000e+00> : vector<64x256xf32>
    %36 = tpu.matmul %34, %35, %cst_18 {dimension_numbers = #tpu.dot_dimension_numbers<[1], [0], [0], [1], [0, 0, 1, 1], [], []>} : vector<64x64xbf16>, vector<64x256xbf16>, vector<64x256xf32> -> vector<64x256xf32>
    %37 = arith.mulf %31#1, %31#2 : vector<64x256xf32>
    %cst_19 = arith.constant 9.99999997E-7 : f32
    %38 = vector.broadcast %cst_19 : f32 to vector<64x256xf32>
    %39 = arith.addf %36, %38 : vector<64x256xf32>
    %40 = tpu.reciprocal %39 {approx = true} : vector<64x256xf32> -> vector<64x256xf32>
    %41 = arith.mulf %37, %40 : vector<64x256xf32>
    %42 = arith.truncf %41 : vector<64x256xf32> to vector<64x256xbf16>
    %cst_20 = arith.constant dense<0.000000e+00> : vector<128x256xf32>
    %43 = tpu.matmul %32, %42, %cst_20 {dimension_numbers = #tpu.dot_dimension_numbers<[0], [0], [1], [1], [0, 1, 1, 1], [], []>} : vector<64x128xbf16>, vector<64x256xbf16>, vector<128x256xf32> -> vector<128x256xf32>
    %c0_21 = arith.constant 0 : index
    %c0_22 = arith.constant 0 : index
    %44 = vector.load %arg5[%c0_21, %c0_22] : memref<128x128xf32, #tpu.memory_space<vmem>>, vector<128x128xf32>
    %45 = arith.truncf %44 : vector<128x128xf32> to vector<128x128xbf16>
    %46 = arith.truncf %43 : vector<128x256xf32> to vector<128x256xbf16>
    %cst_23 = arith.constant dense<0.000000e+00> : vector<128x256xf32>
    %47 = tpu.matmul %45, %46, %cst_23 {dimension_numbers = #tpu.dot_dimension_numbers<[1], [0], [0], [1], [0, 0, 1, 1], [], []>} : vector<128x128xbf16>, vector<128x256xbf16>, vector<128x256xf32> -> vector<128x256xf32>
    %c0_24 = arith.constant 0 : index
    %c0_25 = arith.constant 0 : index
    %48 = vector.load %arg6[%c0_24, %c0_25] : memref<128x1xf32, #tpu.memory_space<vmem>>, vector<128x1xf32>
    %49 = vector.broadcast %48 : vector<128x1xf32> to vector<128x256xf32>
    %50 = arith.addf %47, %49 : vector<128x256xf32>
    %c0_26 = arith.constant 0 : index
    %c0_27 = arith.constant 0 : index
    %c0_28 = arith.constant 0 : index
    %51 = vector.load %arg1[%c0_26, %c0_27, %c0_28] : memref<1x128x256xf32, #tpu.memory_space<vmem>>, vector<1x128x256xf32>
    %52 = vector.shape_cast %51 : vector<1x128x256xf32> to vector<128x256xf32>
    %53 = arith.addf %52, %50 : vector<128x256xf32>
    %cst_29 = arith.constant 0.000000e+00 : f32
    %54 = vector.broadcast %cst_29 : f32 to vector<128x256xf32>
    %55 = arith.maximumf %53, %54 : vector<128x256xf32>
    %c0_30 = arith.constant 0 : index
    %c0_31 = arith.constant 0 : index
    %c0_32 = arith.constant 0 : index
    %56 = vector.load %arg7[%c0_30, %c0_31, %c0_32] : memref<1x128x256xf32, #tpu.memory_space<vmem>>, vector<1x128x256xf32>
    %57 = vector.shape_cast %56 : vector<1x128x256xf32> to vector<128x256xf32>
    %58 = vector.shape_cast %55 : vector<128x256xf32> to vector<1x128x256xf32>
    tpu.vector_store %arg7[%c0_30, %c0_31, %c0_32], %58 {strides = array<i32>} : memref<1x128x256xf32, #tpu.memory_space<vmem>>, vector<1x128x256xf32>,
    return
  }
  func.func @transform_0(%arg0: i32) -> (i32, i32, i32) {
    %c0_i32 = arith.constant 0 : i32
    %c0_i32_0 = arith.constant 0 : i32
    %c0_i32_1 = arith.constant 0 : i32
    return %arg0, %c0_i32, %c0_i32_0 : i32, i32, i32
  }
  func.func @transform_1(%arg0: i32) -> (i32, i32) {
    %c0_i32 = arith.constant 0 : i32
    %c0_i32_0 = arith.constant 0 : i32
    %c0_i32_1 = arith.constant 0 : i32
    return %c0_i32, %c0_i32_0 : i32, i32
  }
  func.func @transform_2(%arg0: i32) -> (i32, i32) {
    %c0_i32 = arith.constant 0 : i32
    %c0_i32_0 = arith.constant 0 : i32
    %c0_i32_1 = arith.constant 0 : i32
    return %c0_i32, %c0_i32_0 : i32, i32
  }
  func.func @transform_3(%arg0: i32) -> (i32, i32, i32) {
    %c0_i32 = arith.constant 0 : i32
    %c0_i32_0 = arith.constant 0 : i32
    %c0_i32_1 = arith.constant 0 : i32
    return %arg0, %c0_i32, %c0_i32_0 : i32, i32, i32
  }
  func.func @transform_4(%arg0: i32) -> (i32, i32) {
    %c0_i32 = arith.constant 0 : i32
    %c0_i32_0 = arith.constant 0 : i32
    %c0_i32_1 = arith.constant 0 : i32
    return %c0_i32, %c0_i32_0 : i32, i32
  }
  func.func @transform_5(%arg0: i32) -> (i32, i32) {
    %c0_i32 = arith.constant 0 : i32
    %c0_i32_0 = arith.constant 0 : i32
    %c0_i32_1 = arith.constant 0 : i32
    return %c0_i32, %c0_i32_0 : i32, i32
  }
  func.func @transform_6(%arg0: i32) -> (i32, i32, i32) {
    %c0_i32 = arith.constant 0 : i32
    %c0_i32_0 = arith.constant 0 : i32
    %c0_i32_1 = arith.constant 0 : i32
    return %arg0, %c0_i32, %c0_i32_0 : i32, i32, i32
  }
}

</mosaic_0001>

<llo_original>
// kernel: tpu_custom_call.1
$region0: #{tpu_custom_call.1}
  #allocation0 [shape = 'u32[]', space=smem, size = 0x4, offset = 0x4, fixed_abs, tag = 'smem constant byte address 0x4 - core index']
  #allocation1 [shape = 'u32[144,128]{1,0:T(1,128)}', space=vmem, size = 0x12000, scoped, tag = 'internal scratch']
  #allocation2 [shape = 'bf16[128,256]{1,0:T(16,128)(2,1)}', space=vmem, size = 0x10000, scoped, tag = 'scratch operand']
  #allocation3 [shape = 'bf16[256,128]{1,0:T(16,128)(2,1)}', space=vmem, size = 0x10000, scoped, tag = 'scratch operand']
  %s0 = inlined_call_operand.hbm [shape: f32[2,128,256], index: 0, kind: input, shape index: {}]
  %s1 = inlined_call_operand.vmem [shape: f32[128,128], index: 1, kind: input, shape index: {}]
  %s2 = inlined_call_operand.vmem [shape: f32[128,1], index: 2, kind: input, shape index: {}]
  %s3 = inlined_call_operand.vmem [shape: f32[2,64,128], index: 3, kind: input, shape index: {}]
  %s4 = inlined_call_operand.hbm [shape: f32[128,128], index: 4, kind: input, shape index: {}]
  %s5 = inlined_call_operand.vmem [shape: f32[128,1], index: 5, kind: input, shape index: {}]
  %s6 = inlined_call_operand.hbm [shape: f32[2,128,256], index: 6, kind: output, shape index: {}]
  %s7 = sld [smem:[#allocation0]]
  $region72: #{tpu_custom_call.1} parent=0
    _
  %s9 = ssub.s32 1, %s7
  %s10 = scalar_select 0, %s9, %s7
  $region1: #{tpu_custom_call.1} parent=0
    #allocation4 [shape = 'u8[262144]{0}', space=vmem, size = 0x40000, scoped, tag = 'input window, operand 0']
    #allocation5 [shape = 's32[2]{0}', space=sflag, size = 0x8, scoped, tag = 'scoped memory for tpu_custom_call.1']
    #allocation6 [shape = 's32[2]{0}', space=sflag, size = 0x8, scoped, tag = 'scoped memory for tpu_custom_call.1']
    #allocation7 [shape = 'u8[65536]{0}', space=vmem, size = 0x10000, scoped, tag = 'input window, operand 4, single buffered']
    #allocation8 [shape = 's32[1]{0}', space=sflag, size = 0x4, scoped, tag = 'scoped memory for tpu_custom_call.1']
    #allocation9 [shape = 'u8[262144]{0}', space=vmem, size = 0x40000, scoped, tag = 'output window, operand 0']
    %11 = vsyncpa [#allocation5], 0
    %s12 = scalar_lea.sflag [#allocation5], 1
    %13 = vsyncpa %s12, 0
    %14 = vsyncpa [#allocation8], 0
    %15 = vsyncpa [#allocation6], 0
    %s16 = scalar_lea.sflag [#allocation6], 1
    %17 = vsyncpa %s16, 0
    loop: start=0, step=1, limit=4
    $region2: #{tpu_custom_call.1} parent=1 // loop_pre_header
      _
    $region3: #{tpu_custom_call.1} parent=1 // loop_header
      %s19 = sphi 0, %s23
      %p20 = scmp.ge.s32.totalorder %s19, 4
      %s29 = sphi 0, %s31
      %s32 = sphi 0, %s29
      %s33 = sphi 0, %s32
      %s49 = sphi 0, %s33
      %s53 = sphi 0, %s53
      %s55 = sphi 0, %s53
      %s56 = sphi 0, %s55
      %s70 = sphi 0, %s56
      %s74 = sphi 0, %s74
      %s76 = sphi 0, %s74
      %s77 = sphi 0, %s76
      %s91 = sphi 0, %s77
      %s97 = sphi 0, %s99
      %s100 = sphi 0, %s97
      %s101 = sphi 0, %s100
      %s117 = sphi 0, %s101
      %s121 = sphi 0, %s121
      %s123 = sphi 0, %s121
      %s124 = sphi 0, %s123
      %s138 = sphi 0, %s124
      %s142 = sphi 0, %s142
      %s144 = sphi 0, %s142
      %s145 = sphi 0, %s144
      %s159 = sphi 0, %s145
      %s165 = sphi 0, %s167
      %s168 = sphi 0, %s165
      %s169 = sphi 0, %s168
      %s185 = sphi 0, %s169
    $region4: #{tpu_custom_call.1} parent=1 // loop_header_branch
      %22 = sbr.rel (%p20) target = $region8
    $region5: #{tpu_custom_call.1} parent=1 // loop_body
      %s24 = ssub.s32 %s19, 1
      %s25 = ssub.s32 %s19, 2
      %s26 = sadd.s32 %s19, 1
      %s27 = ssub.s32 %s19, %s26
      %p28 = scmp.eq.s32.totalorder %s27, 0
      %s30 = sadd.s32 %s29, 1
      %s31 = scalar_select %p28, %s29, %s30
      %p34 = pneg %p28
      %p35 = scmp.eq.s32.totalorder %s19, 1
      %p36 = por %p34, %p35
      %p37 = scmp.ne.s32.totalorder %s29, %s32
      %p38 = scmp.eq.s32.totalorder %s19, 0
      %p39 = por %p37, %p38
      %p40 = scmp.ne.s32.totalorder %s29, %s32
      %p41 = scmp.eq.s32.totalorder %s24, 1
      %p42 = por %p40, %p41
      %p43 = scmp.ne.s32.totalorder %s32, %s33
      %p44 = scmp.eq.s32.totalorder %s24, 0
      %p45 = por %p43, %p44
      %p46 = scmp.ne.s32.totalorder %s32, %s33
      %p47 = scmp.eq.s32.totalorder %s25, 1
      %p48 = por %p46, %p47
      %p50 = scmp.ne.s32.totalorder %s33, %s49
      %p51 = scmp.eq.s32.totalorder %s25, 0
      %p52 = por %p50, %p51
      %s54 = sadd.s32 %s53, 1
      %p57 = scmp.eq.s32.totalorder %s19, 1
      %p58 = scmp.ne.s32.totalorder %s53, %s55
      %p59 = scmp.eq.s32.totalorder %s19, 0
      %p60 = por %p58, %p59
      %p61 = scmp.ne.s32.totalorder %s53, %s55
      %p62 = scmp.eq.s32.totalorder %s24, 1
      %p63 = por %p61, %p62
      %p64 = scmp.ne.s32.totalorder %s55, %s56
      %p65 = scmp.eq.s32.totalorder %s24, 0
      %p66 = por %p64, %p65
      %p67 = scmp.ne.s32.totalorder %s55, %s56
      %p68 = scmp.eq.s32.totalorder %s25, 1
      %p69 = por %p67, %p68
      %p71 = scmp.ne.s32.totalorder %s56, %s70
      %p72 = scmp.eq.s32.totalorder %s25, 0
      %p73 = por %p71, %p72
      %s75 = sadd.s32 %s74, 1
      %p78 = scmp.eq.s32.totalorder %s19, 1
      %p79 = scmp.ne.s32.totalorder %s74, %s76
      %p80 = scmp.eq.s32.totalorder %s19, 0
      %p81 = por %p79, %p80
      %p82 = scmp.ne.s32.totalorder %s74, %s76
      %p83 = scmp.eq.s32.totalorder %s24, 1
      %p84 = por %p82, %p83
      %p85 = scmp.ne.s32.totalorder %s76, %s77
      %p86 = scmp.eq.s32.totalorder %s24, 0
      %p87 = por %p85, %p86
      %p88 = scmp.ne.s32.totalorder %s76, %s77
      %p89 = scmp.eq.s32.totalorder %s25, 1
      %p90 = por %p88, %p89
      %p92 = scmp.ne.s32.totalorder %s77, %s91
      %p93 = scmp.eq.s32.totalorder %s25, 0
      %p94 = por %p92, %p93
      %s95 = ssub.s32 %s19, %s26
      %p96 = scmp.eq.s32.totalorder %s95, 0
      %s98 = sadd.s32 %s97, 1
      %s99 = scalar_select %p96, %s97, %s98
      %p102 = pneg %p96
      %p103 = scmp.eq.s32.totalorder %s19, 1
      %p104 = por %p102, %p103
      %p105 = scmp.ne.s32.totalorder %s97, %s100
      %p106 = scmp.eq.s32.totalorder %s19, 0
      %p107 = por %p105, %p106
      %p108 = scmp.ne.s32.totalorder %s97, %s100
      %p109 = scmp.eq.s32.totalorder %s24, 1
      %p110 = por %p108, %p109
      %p111 = scmp.ne.s32.totalorder %s100, %s101
      %p112 = scmp.eq.s32.totalorder %s24, 0
      %p113 = por %p111, %p112
      %p114 = scmp.ne.s32.totalorder %s100, %s101
      %p115 = scmp.eq.s32.totalorder %s25, 1
      %p116 = por %p114, %p115
      %p118 = scmp.ne.s32.totalorder %s101, %s117
      %p119 = scmp.eq.s32.totalorder %s25, 0
      %p120 = por %p118, %p119
      %s122 = sadd.s32 %s121, 1
      %p125 = scmp.eq.s32.totalorder %s19, 1
      %p126 = scmp.ne.s32.totalorder %s121, %s123
      %p127 = scmp.eq.s32.totalorder %s19, 0
      %p128 = por %p126, %p127
      %p129 = scmp.ne.s32.totalorder %s121, %s123
      %p130 = scmp.eq.s32.totalorder %s24, 1
      %p131 = por %p129, %p130
      %p132 = scmp.ne.s32.totalorder %s123, %s124
      %p133 = scmp.eq.s32.totalorder %s24, 0
      %p134 = por %p132, %p133
      %p135 = scmp.ne.s32.totalorder %s123, %s124
      %p136 = scmp.eq.s32.totalorder %s25, 1
      %p137 = por %p135, %p136
      %p139 = scmp.ne.s32.totalorder %s124, %s138
      %p140 = scmp.eq.s32.totalorder %s25, 0
      %p141 = por %p139, %p140
      %s143 = sadd.s32 %s142, 1
      %p146 = scmp.eq.s32.totalorder %s19, 1
      %p147 = scmp.ne.s32.totalorder %s142, %s144
      %p148 = scmp.eq.s32.totalorder %s19, 0
      %p149 = por %p147, %p148
      %p150 = scmp.ne.s32.totalorder %s142, %s144
      %p151 = scmp.eq.s32.totalorder %s24, 1
      %p152 = por %p150, %p151
      %p153 = scmp.ne.s32.totalorder %s144, %s145
      %p154 = scmp.eq.s32.totalorder %s24, 0
      %p155 = por %p153, %p154
      %p156 = scmp.ne.s32.totalorder %s144, %s145
      %p157 = scmp.eq.s32.totalorder %s25, 1
      %p158 = por %p156, %p157
      %p160 = scmp.ne.s32.totalorder %s145, %s159
      %p161 = scmp.eq.s32.totalorder %s25, 0
      %p162 = por %p160, %p161
      %s163 = ssub.s32 %s19, %s26
      %p164 = scmp.eq.s32.totalorder %s163, 0
      %s166 = sadd.s32 %s165, 1
      %s167 = scalar_select %p164, %s165, %s166
      %p170 = pneg %p164
      %p171 = scmp.eq.s32.totalorder %s19, 1
      %p172 = por %p170, %p171
      %p173 = scmp.ne.s32.totalorder %s165, %s168
      %p174 = scmp.eq.s32.totalorder %s19, 0
      %p175 = por %p173, %p174
      %p176 = scmp.ne.s32.totalorder %s165, %s168
      %p177 = scmp.eq.s32.totalorder %s24, 1
      %p178 = por %p176, %p177
      %p179 = scmp.ne.s32.totalorder %s168, %s169
      %p180 = scmp.eq.s32.totalorder %s24, 0
      %p181 = por %p179, %p180
      %p182 = scmp.ne.s32.totalorder %s168, %s169
      %p183 = scmp.eq.s32.totalorder %s25, 1
      %p184 = por %p182, %p183
      %p186 = scmp.ne.s32.totalorder %s169, %s185
      %p187 = scmp.eq.s32.totalorder %s25, 0
      %p188 = por %p186, %p187
      %p189 = scmp.le.s32.totalorder 1, %s19
      %p190 = scmp.lt.s32.totalorder %s19, 3
      %p191 = pnand %p189, %p190
      %p192 = pneg %p191
      // Predicated region
      $region9: #{tpu_custom_call.1} parent=5 // pred_check
        _
      $region10: #{tpu_custom_call.1} parent=5 // pred_check_branch
        %194 = sbr.rel (%p191) target = $region12
      $region11: #{tpu_custom_call.1} parent=5 // pred_region
        %s195 = ssub.s32 %s19, 1
        // Predicated region
        $region13: #{tpu_custom_call.1} parent=11 // pred_check
          %p196 = pneg %p66
        $region14: #{tpu_custom_call.1} parent=11 // pred_check_branch
          %198 = sbr.rel (%p196) target = $region16
        $region15: #{tpu_custom_call.1} parent=11 // pred_region
          _
        $region16: #{tpu_custom_call.1} parent=11 // pred_fallthru
          _
        // Predicated region
        $region17: #{tpu_custom_call.1} parent=11 // pred_check
          %p199 = pneg %p87
        $region18: #{tpu_custom_call.1} parent=11 // pred_check_branch
          %201 = sbr.rel (%p199) target = $region20
        $region19: #{tpu_custom_call.1} parent=11 // pred_region
          _
        $region20: #{tpu_custom_call.1} parent=11 // pred_fallthru
          _
        // Predicated region
        $region21: #{tpu_custom_call.1} parent=11 // pred_check
          %p202 = pneg %p134
        $region22: #{tpu_custom_call.1} parent=11 // pred_check_branch
          %204 = sbr.rel (%p202) target = $region24
        $region23: #{tpu_custom_call.1} parent=11 // pred_region
          %s206 = ssub.s32 2048, 2048
          %207 = vsyncadd [#allocation8], %s206
          %s208 = sshll.u32 [#allocation7], 4
          %s209 = int_to_ptr.vmem [resolvable:$true] %s208
          %214 = dma.hbm_to_vmem [thread:$0]  %s4, 2048, %s209, [#allocation8], 128, 128, 8
        $region24: #{tpu_custom_call.1} parent=11 // pred_fallthru
          _
        // Predicated region
        $region25: #{tpu_custom_call.1} parent=11 // pred_check
          %p215 = pneg %p155
        $region26: #{tpu_custom_call.1} parent=11 // pred_check_branch
          %217 = sbr.rel (%p215) target = $region28
        $region27: #{tpu_custom_call.1} parent=11 // pred_region
          _
        $region28: #{tpu_custom_call.1} parent=11 // pred_fallthru
          _
      $region12: #{tpu_custom_call.1} parent=5 // pred_fallthru
        _
      %p218 = scmp.lt.s32.totalorder %s19, 2
      // Predicated region
      $region29: #{tpu_custom_call.1} parent=5 // pred_check
        %p219 = pneg %p218
      $region30: #{tpu_custom_call.1} parent=5 // pred_check_branch
        %221 = sbr.rel (%p219) target = $region32
      $region31: #{tpu_custom_call.1} parent=5 // pred_region
        // Predicated region
        $region33: #{tpu_custom_call.1} parent=31 // pred_check
          %p222 = pneg %p39
        $region34: #{tpu_custom_call.1} parent=31 // pred_check_branch
          %224 = sbr.rel (%p222) target = $region36
        $region35: #{tpu_custom_call.1} parent=31 // pred_region
          %s225 = sand.u32 %s29, 1
          %s226 = scalar_lea.sflag [#allocation5], %s225
          %s227 = sand.u32 %s29, 1
          %s228 = smul.addr %s227, 256
          %s229 = scalar_lea.vmem [#allocation4], %s228
          %s231 = ssub.s32 4096, 4096
          %232 = vsyncadd %s226, %s231
          %s233 = smul.addr %s19, 32
          %s234 = smul.addr %s233, 128
          %s235 = scalar_lea.hbm %s0, %s234
          %s236 = sshll.u32 %s229, 4
          %s237 = int_to_ptr.vmem [resolvable:$true] %s236
          %242 = dma.hbm_to_vmem [thread:$0]  %s235, 4096, %s237, %s226, 256, 256, 16
        $region36: #{tpu_custom_call.1} parent=31 // pred_fallthru
          _
        // Predicated region
        $region37: #{tpu_custom_call.1} parent=31 // pred_check
          %p243 = pneg %p107
        $region38: #{tpu_custom_call.1} parent=31 // pred_check_branch
          %245 = sbr.rel (%p243) target = $region40
        $region39: #{tpu_custom_call.1} parent=31 // pred_region
          %p246 = scmp.lt.s32.totalorder %s19, 1
          %s247 = scalar_select %p246, %s19, 1
          %s248 = smul.addr %s247, 8
          %s249 = smul.addr %s248, 8
          %s250 = scalar_lea.vmem %s3, %s249
        $region40: #{tpu_custom_call.1} parent=31 // pred_fallthru
          _
      $region32: #{tpu_custom_call.1} parent=5 // pred_fallthru
        _
      %p251 = scmp.le.s32.totalorder 1, %s19
      %p252 = scmp.lt.s32.totalorder %s19, 3
      %p253 = pnand %p251, %p252
      %p254 = pneg %p253
      // Predicated region
      $region41: #{tpu_custom_call.1} parent=5 // pred_check
        _
      $region42: #{tpu_custom_call.1} parent=5 // pred_check_branch
        %256 = sbr.rel (%p253) target = $region44
      $region43: #{tpu_custom_call.1} parent=5 // pred_region
        %s257 = ssub.s32 %s19, 1
        %s258 = sand.u32 %s32, 1
        %s259 = scalar_lea.sflag [#allocation5], %s258
        %s260 = sand.u32 %s32, 1
        %s261 = smul.addr %s260, 256
        %s262 = scalar_lea.vmem [#allocation4], %s261
        // Predicated region
        $region45: #{tpu_custom_call.1} parent=43 // pred_check
          %p263 = pneg %p45
        $region46: #{tpu_custom_call.1} parent=43 // pred_check_branch
          %265 = sbr.rel (%p263) target = $region48
        $region47: #{tpu_custom_call.1} parent=43 // pred_region
          %266 = dma.done %s259, 4096
        $region48: #{tpu_custom_call.1} parent=43 // pred_fallthru
          _
        // Predicated region
        $region49: #{tpu_custom_call.1} parent=43 // pred_check
          %p267 = pneg %p134
        $region50: #{tpu_custom_call.1} parent=43 // pred_check_branch
          %269 = sbr.rel (%p267) target = $region52
        $region51: #{tpu_custom_call.1} parent=43 // pred_region
          %270 = dma.done [#allocation8], 2048
        $region52: #{tpu_custom_call.1} parent=43 // pred_fallthru
          _
        %s271 = sand.u32 %s32, 1
        %s272 = scalar_lea.sflag [#allocation5], %s271
        %s273 = sand.u32 %s32, 1
        %s274 = smul.addr %s273, 256
        %s275 = scalar_lea.vmem [#allocation4], %s274
        %p276 = pneg %p45
        %p277 = pneg %p42
        %p278 = pneg %p66
        %p279 = pneg %p63
        %p280 = pneg %p87
        %p281 = pneg %p84
        %p282 = scmp.lt.s32.totalorder %s24, 1
        %s283 = scalar_select %p282, %s24, 1
        %s284 = smul.addr %s283, 8
        %s285 = smul.addr %s284, 8
        %s286 = scalar_lea.vmem %s3, %s285
        %p287 = pneg %p113
        %p288 = pneg %p110
        %p289 = pneg %p134
        %p290 = pneg %p131
        %p291 = pneg %p155
        %p292 = pneg %p152
        %p293 = pneg %p181
        %p294 = pneg %p178
        %s295 = sand.u32 %s168, 1
        %s296 = scalar_lea.sflag [#allocation6], %s295
        %s297 = sand.u32 %s168, 1
        %s298 = smul.addr %s297, 256
        %s299 = scalar_lea.vmem [#allocation9], %s298
        %p300 = scmp.lt.s32.totalorder %s24, 1
        %s301 = scalar_select %p300, %s24, 1
        %s302 = smul.addr %s301, 8
        %s303 = smul.addr %s302, 8
        %s304 = scalar_lea.vmem %s3, %s303
        %v306 = vld [vmem:[%s262] sm:$0xff]
        %v307 = vld [vmem:[%s262 + $0x8] sm:$0xff]
        %v308 = vld [vmem:[%s262 + $0x10] sm:$0xff]
        %v309 = vld [vmem:[%s262 + $0x18] sm:$0xff]
        %v310 = vld [vmem:[%s262 + $0x20] sm:$0xff]
        %v311 = vld [vmem:[%s262 + $0x28] sm:$0xff]
        %v312 = vld [vmem:[%s262 + $0x30] sm:$0xff]
        %v313 = vld [vmem:[%s262 + $0x38] sm:$0xff]
        %v314 = vld [vmem:[%s262 + $0x40] sm:$0xff]
        %v315 = vld [vmem:[%s262 + $0x48] sm:$0xff]
        %v316 = vld [vmem:[%s262 + $0x50] sm:$0xff]
        %v317 = vld [vmem:[%s262 + $0x58] sm:$0xff]
        %v318 = vld [vmem:[%s262 + $0x60] sm:$0xff]
        %v319 = vld [vmem:[%s262 + $0x68] sm:$0xff]
        %v320 = vld [vmem:[%s262 + $0x70] sm:$0xff]
        %v321 = vld [vmem:[%s262 + $0x78] sm:$0xff]
        %v322 = vld [vmem:[%s262 + $0x80] sm:$0xff]
        %v323 = vld [vmem:[%s262 + $0x88] sm:$0xff]
        %v324 = vld [vmem:[%s262 + $0x90] sm:$0xff]
        %v325 = vld [vmem:[%s262 + $0x98] sm:$0xff]
        %v326 = vld [vmem:[%s262 + $0xa0] sm:$0xff]
        %v327 = vld [vmem:[%s262 + $0xa8] sm:$0xff]
        %v328 = vld [vmem:[%s262 + $0xb0] sm:$0xff]
        %v329 = vld [vmem:[%s262 + $0xb8] sm:$0xff]
        %v330 = vld [vmem:[%s262 + $0xc0] sm:$0xff]
        %v331 = vld [vmem:[%s262 + $0xc8] sm:$0xff]
        %v332 = vld [vmem:[%s262 + $0xd0] sm:$0xff]
        %v333 = vld [vmem:[%s262 + $0xd8] sm:$0xff]
        %v334 = vld [vmem:[%s262 + $0xe0] sm:$0xff]
        %v335 = vld [vmem:[%s262 + $0xe8] sm:$0xff]
        %v336 = vld [vmem:[%s262 + $0xf0] sm:$0xff]
        %v337 = vld [vmem:[%s262 + $0xf8] sm:$0xff]
        %v338 = vpack.c.bf16 %v308, %v306
        %v339 = vpack.c.bf16 %v309, %v307
        %v340 = vpack.c.bf16 %v312, %v310
        %v341 = vpack.c.bf16 %v313, %v311
        %v342 = vpack.c.bf16 %v316, %v314
        %v343 = vpack.c.bf16 %v317, %v315
        %v344 = vpack.c.bf16 %v320, %v318
        %v345 = vpack.c.bf16 %v321, %v319
        %v346 = vpack.c.bf16 %v324, %v322
        %v347 = vpack.c.bf16 %v325, %v323
        %v348 = vpack.c.bf16 %v328, %v326
        %v349 = vpack.c.bf16 %v329, %v327
        %v350 = vpack.c.bf16 %v332, %v330
        %v351 = vpack.c.bf16 %v333, %v331
        %v352 = vpack.c.bf16 %v336, %v334
        %v353 = vpack.c.bf16 %v337, %v335
        %v354 = vld [vmem:[%s1] sm:$0xff]
        %v355 = vld [vmem:[%s1 + $0x8] sm:$0xff]
        %v356 = vld [vmem:[%s1 + $0x10] sm:$0xff]
        %v357 = vld [vmem:[%s1 + $0x18] sm:$0xff]
        %v358 = vld [vmem:[%s1 + $0x20] sm:$0xff]
        %v359 = vld [vmem:[%s1 + $0x28] sm:$0xff]
        %v360 = vld [vmem:[%s1 + $0x30] sm:$0xff]
        %v361 = vld [vmem:[%s1 + $0x38] sm:$0xff]
        %v362 = vld [vmem:[%s1 + $0x40] sm:$0xff]
        %v363 = vld [vmem:[%s1 + $0x48] sm:$0xff]
        %v364 = vld [vmem:[%s1 + $0x50] sm:$0xff]
        %v365 = vld [vmem:[%s1 + $0x58] sm:$0xff]
        %v366 = vld [vmem:[%s1 + $0x60] sm:$0xff]
        %v367 = vld [vmem:[%s1 + $0x68] sm:$0xff]
        %v368 = vld [vmem:[%s1 + $0x70] sm:$0xff]
        %v369 = vld [vmem:[%s1 + $0x78] sm:$0xff]
        %v370 = vpack.c.bf16 %v355, %v354
        %v371 = vpack.c.bf16 %v357, %v356
        %v372 = vpack.c.bf16 %v359, %v358
        %v373 = vpack.c.bf16 %v361, %v360
        %v374 = vpack.c.bf16 %v363, %v362
        %v375 = vpack.c.bf16 %v365, %v364
        %v376 = vpack.c.bf16 %v367, %v366
        %v377 = vpack.c.bf16 %v369, %v368
        %v378 = vld [vmem:[%s2] sm:$0xff]
        %v379 = vld [vmem:[%s2 + $0x8] sm:$0xff]
        %v380 = vld [vmem:[%s2 + $0x10] sm:$0xff]
        %v381 = vld [vmem:[%s2 + $0x18] sm:$0xff]
        %v382 = vld [vmem:[%s2 + $0x20] sm:$0xff]
        %v383 = vld [vmem:[%s2 + $0x28] sm:$0xff]
        %v384 = vld [vmem:[%s2 + $0x30] sm:$0xff]
        %v385 = vld [vmem:[%s2 + $0x38] sm:$0xff]
        %v386 = vld [vmem:[%s2 + $0x40] sm:$0xff]
        %v387 = vld [vmem:[%s2 + $0x48] sm:$0xff]
        %v388 = vld [vmem:[%s2 + $0x50] sm:$0xff]
        %v389 = vld [vmem:[%s2 + $0x58] sm:$0xff]
        %v390 = vld [vmem:[%s2 + $0x60] sm:$0xff]
        %v391 = vld [vmem:[%s2 + $0x68] sm:$0xff]
        %v392 = vld [vmem:[%s2 + $0x70] sm:$0xff]
        %v393 = vld [vmem:[%s2 + $0x78] sm:$0xff]
        %395 = vset.pattern.permute.xlu0 0
        %396 = vperm.xlu0 %395, %v378
        %v397 = vpop.permute.xlu0 %396
        %400 = vset.pattern.permute.xlu0 0
        %401 = vperm.xlu0 %400, %v379
        %v402 = vpop.permute.xlu0 %401
        %405 = vset.pattern.permute.xlu0 0
        %406 = vperm.xlu0 %405, %v380
        %v407 = vpop.permute.xlu0 %406
        %410 = vset.pattern.permute.xlu0 0
        %411 = vperm.xlu0 %410, %v381
        %v412 = vpop.permute.xlu0 %411
        %415 = vset.pattern.permute.xlu0 0
        %416 = vperm.xlu0 %415, %v382
        %v417 = vpop.permute.xlu0 %416
        %420 = vset.pattern.permute.xlu0 0
        %421 = vperm.xlu0 %420, %v383
        %v422 = vpop.permute.xlu0 %421
        %425 = vset.pattern.permute.xlu0 0
        %426 = vperm.xlu0 %425, %v384
        %v427 = vpop.permute.xlu0 %426
        %430 = vset.pattern.permute.xlu0 0
        %431 = vperm.xlu0 %430, %v385
        %v432 = vpop.permute.xlu0 %431
        %435 = vset.pattern.permute.xlu0 0
        %436 = vperm.xlu0 %435, %v386
        %v437 = vpop.permute.xlu0 %436
        %440 = vset.pattern.permute.xlu0 0
        %441 = vperm.xlu0 %440, %v387
        %v442 = vpop.permute.xlu0 %441
        %445 = vset.pattern.permute.xlu0 0
        %446 = vperm.xlu0 %445, %v388
        %v447 = vpop.permute.xlu0 %446
        %450 = vset.pattern.permute.xlu0 0
        %451 = vperm.xlu0 %450, %v389
        %v452 = vpop.permute.xlu0 %451
        %455 = vset.pattern.permute.xlu0 0
        %456 = vperm.xlu0 %455, %v390
        %v457 = vpop.permute.xlu0 %456
        %460 = vset.pattern.permute.xlu0 0
        %461 = vperm.xlu0 %460, %v391
        %v462 = vpop.permute.xlu0 %461
        %465 = vset.pattern.permute.xlu0 0
        %466 = vperm.xlu0 %465, %v392
        %v467 = vpop.permute.xlu0 %466
        %470 = vset.pattern.permute.xlu0 0
        %471 = vperm.xlu0 %470, %v393
        %v472 = vpop.permute.xlu0 %471
        %474 = vmatprep.subr.bf16.mxu0 %v339
        %475 = vmatpush1.bf16.msra.mxu0 %v338
        %476 = vmatprep.subr.bf16.mxu0 %v341
        %477 = vmatpush1.bf16.msra.mxu0 %v340
        %478 = vmatprep.subr.bf16.mxu0 %v343
        %479 = vmatpush1.bf16.msra.mxu0 %v342
        %480 = vmatprep.subr.bf16.mxu0 %v345
        %481 = vmatpush1.bf16.msra.mxu0 %v344
        %482 = vmatprep.subr.bf16.mxu0 %v347
        %483 = vmatpush1.bf16.msra.mxu0 %v346
        %484 = vmatprep.subr.bf16.mxu0 %v349
        %485 = vmatpush1.bf16.msra.mxu0 %v348
        %486 = vmatprep.subr.bf16.mxu0 %v351
        %487 = vmatpush1.bf16.msra.mxu0 %v350
        %488 = vmatprep.subr.bf16.mxu0 %v353
        %489 = vmatpush1.bf16.msra.mxu0 %v352
        %490 = vmatprep.subr.bf16.mxu0 0
        %491 = vmatpush1.bf16.msra.mxu0 0
        %492 = vmatprep.subr.bf16.mxu0 0
        %493 = vmatpush1.bf16.msra.mxu0 0
        %494 = vmatprep.subr.bf16.mxu0 0
        %495 = vmatpush1.bf16.msra.mxu0 0
        %496 = vmatprep.subr.bf16.mxu0 0
        %497 = vmatpush1.bf16.msra.mxu0 0
        %498 = vmatprep.subr.bf16.mxu0 0
        %499 = vmatpush1.bf16.msra.mxu0 0
        %500 = vmatprep.subr.bf16.mxu0 0
        %501 = vmatpush1.bf16.msra.mxu0 0
        %502 = vmatprep.subr.bf16.mxu0 0
        %503 = vmatpush1.bf16.msra.mxu0 0
        %504 = vmatprep.subr.bf16.mxu0 0
        %505 = vmatpush1.bf16.msra.mxu0 0
        %506 = vmatprep.mubr.bf16.mxu0 0
        %507 = vmatmul.mubr.bf16.gmra.mrb[0].mxu0 %v370
        %v508 = vpop.f32.mrb[0].mxu0
        %v509 = vadd.f32 %v397, %v508
        %v510 = vpop.f32.mrb[0].mxu0
        %v511 = vadd.f32 %v397, %v510
        %v512 = vpop.f32.mrb[0].mxu0
        %v513 = vadd.f32 %v402, %v512
        %v514 = vpop.f32.mrb[0].mxu0
        %v515 = vadd.f32 %v402, %v514
        %516 = vmatprep.mubr.bf16.mxu0 0
        %517 = vmatmul.mubr.bf16.gmra.mrb[0].mxu0 %v371
        %v518 = vpop.f32.mrb[0].mxu0
        %v519 = vadd.f32 %v407, %v518
        %v520 = vpop.f32.mrb[0].mxu0
        %v521 = vadd.f32 %v407, %v520
        %v522 = vpop.f32.mrb[0].mxu0
        %v523 = vadd.f32 %v412, %v522
        %v524 = vpop.f32.mrb[0].mxu0
        %v525 = vadd.f32 %v412, %v524
        %526 = vmatprep.mubr.bf16.mxu0 0
        %527 = vmatmul.mubr.bf16.gmra.mrb[0].mxu0 %v372
        %v528 = vpop.f32.mrb[0].mxu0
        %v529 = vadd.f32 %v417, %v528
        %v530 = vpop.f32.mrb[0].mxu0
        %v531 = vadd.f32 %v417, %v530
        %v532 = vpop.f32.mrb[0].mxu0
        %v533 = vadd.f32 %v422, %v532
        %v534 = vpop.f32.mrb[0].mxu0
        %v535 = vadd.f32 %v422, %v534
        %536 = vmatprep.mubr.bf16.mxu0 0
        %537 = vmatmul.mubr.bf16.gmra.mrb[0].mxu0 %v373
        %v538 = vpop.f32.mrb[0].mxu0
        %v539 = vadd.f32 %v427, %v538
        %v540 = vpop.f32.mrb[0].mxu0
        %v541 = vadd.f32 %v427, %v540
        %v542 = vpop.f32.mrb[0].mxu0
        %v543 = vadd.f32 %v432, %v542
        %v544 = vpop.f32.mrb[0].mxu0
        %v545 = vadd.f32 %v432, %v544
        %546 = vmatprep.mubr.bf16.mxu0 0
        %547 = vmatmul.mubr.bf16.gmra.mrb[0].mxu0 %v374
        %v548 = vpop.f32.mrb[0].mxu0
        %v549 = vadd.f32 %v437, %v548
        %v550 = vpop.f32.mrb[0].mxu0
        %v551 = vadd.f32 %v437, %v550
        %v552 = vpop.f32.mrb[0].mxu0
        %v553 = vadd.f32 %v442, %v552
        %v554 = vpop.f32.mrb[0].mxu0
        %v555 = vadd.f32 %v442, %v554
        %556 = vmatprep.mubr.bf16.mxu0 0
        %557 = vmatmul.mubr.bf16.gmra.mrb[0].mxu0 %v375
        %v558 = vpop.f32.mrb[0].mxu0
        %v559 = vadd.f32 %v447, %v558
        %v560 = vpop.f32.mrb[0].mxu0
        %v561 = vadd.f32 %v447, %v560
        %v562 = vpop.f32.mrb[0].mxu0
        %v563 = vadd.f32 %v452, %v562
        %v564 = vpop.f32.mrb[0].mxu0
        %v565 = vadd.f32 %v452, %v564
        %566 = vmatprep.mubr.bf16.mxu0 0
        %567 = vmatmul.mubr.bf16.gmra.mrb[0].mxu0 %v376
        %v568 = vpop.f32.mrb[0].mxu0
        %v569 = vadd.f32 %v457, %v568
        %v570 = vpop.f32.mrb[0].mxu0
        %v571 = vadd.f32 %v457, %v570
        %v572 = vpop.f32.mrb[0].mxu0
        %v573 = vadd.f32 %v462, %v572
        %v574 = vpop.f32.mrb[0].mxu0
        %v575 = vadd.f32 %v462, %v574
        %576 = vmatprep.mubr.bf16.mxu0 0
        %577 = vmatmul.mubr.bf16.gmra.mrb[0].mxu0 %v377
        %v578 = vpop.f32.mrb[0].mxu0
        %v579 = vadd.f32 %v467, %v578
        %v580 = vpop.f32.mrb[0].mxu0
        %v581 = vadd.f32 %v467, %v580
        %v582 = vpop.f32.mrb[0].mxu0
        %v583 = vadd.f32 %v472, %v582
        %v584 = vpop.f32.mrb[0].mxu0
        %v585 = vadd.f32 %v472, %v584
        %586 = vdwg.mxu0
        %v587 = vmax.f32 %v509, 0.0
        %v588 = vmax.f32 %v511, 0.0
        %v589 = vmax.f32 %v513, 0.0
        %v590 = vmax.f32 %v515, 0.0
        %v591 = vmax.f32 %v519, 0.0
        %v592 = vmax.f32 %v521, 0.0
        %v593 = vmax.f32 %v523, 0.0
        %v594 = vmax.f32 %v525, 0.0
        %v595 = vmax.f32 %v529, 0.0
        %v596 = vmax.f32 %v531, 0.0
        %v597 = vmax.f32 %v533, 0.0
        %v598 = vmax.f32 %v535, 0.0
        %v599 = vmax.f32 %v539, 0.0
        %v600 = vmax.f32 %v541, 0.0
        %v601 = vmax.f32 %v543, 0.0
        %v602 = vmax.f32 %v545, 0.0
        %v603 = vmax.f32 %v549, 0.0
        %v604 = vmax.f32 %v551, 0.0
        %v605 = vmax.f32 %v553, 0.0
        %v606 = vmax.f32 %v555, 0.0
        %v607 = vmax.f32 %v559, 0.0
        %v608 = vmax.f32 %v561, 0.0
        %v609 = vmax.f32 %v563, 0.0
        %v610 = vmax.f32 %v565, 0.0
        %v611 = vmax.f32 %v569, 0.0
        %v612 = vmax.f32 %v571, 0.0
        %v613 = vmax.f32 %v573, 0.0
        %v614 = vmax.f32 %v575, 0.0
        %v615 = vmax.f32 %v579, 0.0
        %v616 = vmax.f32 %v581, 0.0
        %v617 = vmax.f32 %v583, 0.0
        %v618 = vmax.f32 %v585, 0.0
        %v619 = vpack.c.bf16 %v589, %v587
        %v620 = vpack.c.bf16 %v590, %v588
        %v621 = vpack.c.bf16 %v593, %v591
        %v622 = vpack.c.bf16 %v594, %v592
        %v623 = vpack.c.bf16 %v597, %v595
        %v624 = vpack.c.bf16 %v598, %v596
        %v625 = vpack.c.bf16 %v601, %v599
        %v626 = vpack.c.bf16 %v602, %v600
        %v627 = vpack.c.bf16 %v605, %v603
        %v628 = vpack.c.bf16 %v606, %v604
        %v629 = vpack.c.bf16 %v609, %v607
        %v630 = vpack.c.bf16 %v610, %v608
        %v631 = vpack.c.bf16 %v613, %v611
        %v632 = vpack.c.bf16 %v614, %v612
        %v633 = vpack.c.bf16 %v617, %v615
        %v634 = vpack.c.bf16 %v618, %v616
        %635 = vst [vmem:[#allocation2] sm:$0xff] %v619
        %636 = vst [vmem:[#allocation2 + $0x8] sm:$0xff] %v620
        %637 = vst [vmem:[#allocation2 + $0x10] sm:$0xff] %v621
        %638 = vst [vmem:[#allocation2 + $0x18] sm:$0xff] %v622
        %639 = vst [vmem:[#allocation2 + $0x20] sm:$0xff] %v623
        %640 = vst [vmem:[#allocation2 + $0x28] sm:$0xff] %v624
        %641 = vst [vmem:[#allocation2 + $0x30] sm:$0xff] %v625
        %642 = vst [vmem:[#allocation2 + $0x38] sm:$0xff] %v626
        %643 = vst [vmem:[#allocation2 + $0x40] sm:$0xff] %v627
        %644 = vst [vmem:[#allocation2 + $0x48] sm:$0xff] %v628
        %645 = vst [vmem:[#allocation2 + $0x50] sm:$0xff] %v629
        %646 = vst [vmem:[#allocation2 + $0x58] sm:$0xff] %v630
        %647 = vst [vmem:[#allocation2 + $0x60] sm:$0xff] %v631
        %648 = vst [vmem:[#allocation2 + $0x68] sm:$0xff] %v632
        %649 = vst [vmem:[#allocation2 + $0x70] sm:$0xff] %v633
        %650 = vst [vmem:[#allocation2 + $0x78] sm:$0xff] %v634
        %651 = vxpose.xlu0.b32.start [1/16] %v587, 128
        %652 = vxpose.xlu0.b32.cont [2/16] %v589, 128
        %653 = vxpose.xlu0.b32.cont [3/16] %v591, 128
        %654 = vxpose.xlu0.b32.cont [4/16] %v593, 128
        %655 = vxpose.xlu0.b32.cont [5/16] %v595, 128
        %656 = vxpose.xlu0.b32.cont [6/16] %v597, 128
        %657 = vxpose.xlu0.b32.cont [7/16] %v599, 128
        %658 = vxpose.xlu0.b32.cont [8/16] %v601, 128
        %659 = vxpose.xlu0.b32.cont [9/16] %v603, 128
        %660 = vxpose.xlu0.b32.cont [10/16] %v605, 128
        %661 = vxpose.xlu0.b32.cont [11/16] %v607, 128
        %662 = vxpose.xlu0.b32.cont [12/16] %v609, 128
        %663 = vxpose.xlu0.b32.cont [13/16] %v611, 128
        %664 = vxpose.xlu0.b32.cont [14/16] %v613, 128
        %665 = vxpose.xlu0.b32.cont [15/16] %v615, 128
        %666 = vxpose.xlu0.b32.end [16/16] %v617, 128
        %v667 = vpop.trf.xlu0
        %v668 = vpop.trf.xlu0
        %v669 = vpop.trf.xlu0
        %v670 = vpop.trf.xlu0
        %v671 = vpop.trf.xlu0
        %v672 = vpop.trf.xlu0
        %v673 = vpop.trf.xlu0
        %v674 = vpop.trf.xlu0
        %v675 = vpop.trf.xlu0
        %v676 = vpop.trf.xlu0
        %v677 = vpop.trf.xlu0
        %v678 = vpop.trf.xlu0
        %v679 = vpop.trf.xlu0
        %v680 = vpop.trf.xlu0
        %v681 = vpop.trf.xlu0
        %v682 = vpop.trf.xlu0
        %683 = vxpose.xlu0.b32.start [1/16] %v588, 128
        %684 = vxpose.xlu0.b32.cont [2/16] %v590, 128
        %685 = vxpose.xlu0.b32.cont [3/16] %v592, 128
        %686 = vxpose.xlu0.b32.cont [4/16] %v594, 128
        %687 = vxpose.xlu0.b32.cont [5/16] %v596, 128
        %688 = vxpose.xlu0.b32.cont [6/16] %v598, 128
        %689 = vxpose.xlu0.b32.cont [7/16] %v600, 128
        %690 = vxpose.xlu0.b32.cont [8/16] %v602, 128
        %691 = vxpose.xlu0.b32.cont [9/16] %v604, 128
        %692 = vxpose.xlu0.b32.cont [10/16] %v606, 128
        %693 = vxpose.xlu0.b32.cont [11/16] %v608, 128
        %694 = vxpose.xlu0.b32.cont [12/16] %v610, 128
        %695 = vxpose.xlu0.b32.cont [13/16] %v612, 128
        %696 = vxpose.xlu0.b32.cont [14/16] %v614, 128
        %697 = vxpose.xlu0.b32.cont [15/16] %v616, 128
        %698 = vxpose.xlu0.b32.end [16/16] %v618, 128
        %v699 = vpop.trf.xlu0
        %v700 = vpop.trf.xlu0
        %v701 = vpop.trf.xlu0
        %v702 = vpop.trf.xlu0
        %v703 = vpop.trf.xlu0
        %v704 = vpop.trf.xlu0
        %v705 = vpop.trf.xlu0
        %v706 = vpop.trf.xlu0
        %v707 = vpop.trf.xlu0
        %v708 = vpop.trf.xlu0
        %v709 = vpop.trf.xlu0
        %v710 = vpop.trf.xlu0
        %v711 = vpop.trf.xlu0
        %v712 = vpop.trf.xlu0
        %v713 = vpop.trf.xlu0
        %v714 = vpop.trf.xlu0
        %v715 = vpack.c.bf16 %v668, %v667
        %v716 = vpack.c.bf16 %v670, %v669
        %v717 = vpack.c.bf16 %v672, %v671
        %v718 = vpack.c.bf16 %v674, %v673
        %v719 = vpack.c.bf16 %v676, %v675
        %v720 = vpack.c.bf16 %v678, %v677
        %v721 = vpack.c.bf16 %v680, %v679
        %v722 = vpack.c.bf16 %v682, %v681
        %v723 = vpack.c.bf16 %v700, %v699
        %v724 = vpack.c.bf16 %v702, %v701
        %v725 = vpack.c.bf16 %v704, %v703
        %v726 = vpack.c.bf16 %v706, %v705
        %v727 = vpack.c.bf16 %v708, %v707
        %v728 = vpack.c.bf16 %v710, %v709
        %v729 = vpack.c.bf16 %v712, %v711
        %v730 = vpack.c.bf16 %v714, %v713
        %731 = vst [vmem:[#allocation3] sm:$0xff] %v715
        %732 = vst [vmem:[#allocation3 + $0x8] sm:$0xff] %v716
        %733 = vst [vmem:[#allocation3 + $0x10] sm:$0xff] %v717
        %734 = vst [vmem:[#allocation3 + $0x18] sm:$0xff] %v718
        %735 = vst [vmem:[#allocation3 + $0x20] sm:$0xff] %v719
        %736 = vst [vmem:[#allocation3 + $0x28] sm:$0xff] %v720
        %737 = vst [vmem:[#allocation3 + $0x30] sm:$0xff] %v721
        %738 = vst [vmem:[#allocation3 + $0x38] sm:$0xff] %v722
        %739 = vst [vmem:[#allocation3 + $0x40] sm:$0xff] %v723
        %740 = vst [vmem:[#allocation3 + $0x48] sm:$0xff] %v724
        %741 = vst [vmem:[#allocation3 + $0x50] sm:$0xff] %v725
        %742 = vst [vmem:[#allocation3 + $0x58] sm:$0xff] %v726
        %743 = vst [vmem:[#allocation3 + $0x60] sm:$0xff] %v727
        %744 = vst [vmem:[#allocation3 + $0x68] sm:$0xff] %v728
        %745 = vst [vmem:[#allocation3 + $0x70] sm:$0xff] %v729
        %746 = vst [vmem:[#allocation3 + $0x78] sm:$0xff] %v730
        %v747 = vld [vmem:[%s304] sm:$0xff]
        %v748 = vld [vmem:[%s304 + $0x8] sm:$0xff]
        %v749 = vld [vmem:[%s304 + $0x10] sm:$0xff]
        %v750 = vld [vmem:[%s304 + $0x18] sm:$0xff]
        %v751 = vld [vmem:[%s304 + $0x20] sm:$0xff]
        %v752 = vld [vmem:[%s304 + $0x28] sm:$0xff]
        %v753 = vld [vmem:[%s304 + $0x30] sm:$0xff]
        %v754 = vld [vmem:[%s304 + $0x38] sm:$0xff]
        %v755 = vpack.c.bf16 %v748, %v747
        %v756 = vpack.c.bf16 %v750, %v749
        %v757 = vpack.c.bf16 %v752, %v751
        %v758 = vpack.c.bf16 %v754, %v753
        %759 = vmatprep.subr.bf16.mxu0 %v620
        %760 = vmatpush1.bf16.msra.mxu0 %v619
        %761 = vmatprep.subr.bf16.mxu0 %v622
        %762 = vmatpush1.bf16.msra.mxu0 %v621
        %763 = vmatprep.subr.bf16.mxu0 %v624
        %764 = vmatpush1.bf16.msra.mxu0 %v623
        %765 = vmatprep.subr.bf16.mxu0 %v626
        %766 = vmatpush1.bf16.msra.mxu0 %v625
        %767 = vmatprep.subr.bf16.mxu0 %v628
        %768 = vmatpush1.bf16.msra.mxu0 %v627
        %769 = vmatprep.subr.bf16.mxu0 %v630
        %770 = vmatpush1.bf16.msra.mxu0 %v629
        %771 = vmatprep.subr.bf16.mxu0 %v632
        %772 = vmatpush1.bf16.msra.mxu0 %v631
        %773 = vmatprep.subr.bf16.mxu0 %v634
        %774 = vmatpush1.bf16.msra.mxu0 %v633
        %775 = vmatprep.subr.bf16.mxu0 0
        %776 = vmatpush1.bf16.msra.mxu0 0
        %777 = vmatprep.subr.bf16.mxu0 0
        %778 = vmatpush1.bf16.msra.mxu0 0
        %779 = vmatprep.subr.bf16.mxu0 0
        %780 = vmatpush1.bf16.msra.mxu0 0
        %781 = vmatprep.subr.bf16.mxu0 0
        %782 = vmatpush1.bf16.msra.mxu0 0
        %783 = vmatprep.subr.bf16.mxu0 0
        %784 = vmatpush1.bf16.msra.mxu0 0
        %785 = vmatprep.subr.bf16.mxu0 0
        %786 = vmatpush1.bf16.msra.mxu0 0
        %787 = vmatprep.subr.bf16.mxu0 0
        %788 = vmatpush1.bf16.msra.mxu0 0
        %789 = vmatprep.subr.bf16.mxu0 0
        %790 = vmatpush1.bf16.msra.mxu0 0
        %791 = vmatprep.mubr.bf16.mxu0 0
        %792 = vmatmul.mubr.bf16.gmra.mrb[0].mxu0 %v755
        %v793 = vpop.f32.mrb[0].mxu0
        %v794 = vadd.f32 0.0, %v793
        %v795 = vpop.f32.mrb[0].mxu0
        %v796 = vadd.f32 0.0, %v795
        %v797 = vpop.f32.mrb[0].mxu0
        %v798 = vadd.f32 0.0, %v797
        %v799 = vpop.f32.mrb[0].mxu0
        %v800 = vadd.f32 0.0, %v799
        %801 = vmatprep.mubr.bf16.mxu0 0
        %802 = vmatmul.mubr.bf16.gmra.mrb[0].mxu0 %v756
        %v803 = vpop.f32.mrb[0].mxu0
        %v804 = vadd.f32 0.0, %v803
        %v805 = vpop.f32.mrb[0].mxu0
        %v806 = vadd.f32 0.0, %v805
        %v807 = vpop.f32.mrb[0].mxu0
        %v808 = vadd.f32 0.0, %v807
        %v809 = vpop.f32.mrb[0].mxu0
        %v810 = vadd.f32 0.0, %v809
        %811 = vmatprep.mubr.bf16.mxu0 0
        %812 = vmatmul.mubr.bf16.gmra.mrb[0].mxu0 %v757
        %v813 = vpop.f32.mrb[0].mxu0
        %v814 = vadd.f32 0.0, %v813
        %v815 = vpop.f32.mrb[0].mxu0
        %v816 = vadd.f32 0.0, %v815
        %v817 = vpop.f32.mrb[0].mxu0
        %v818 = vadd.f32 0.0, %v817
        %v819 = vpop.f32.mrb[0].mxu0
        %v820 = vadd.f32 0.0, %v819
        %821 = vmatprep.mubr.bf16.mxu0 0
        %822 = vmatmul.mubr.bf16.gmra.mrb[0].mxu0 %v758
        %v823 = vpop.f32.mrb[0].mxu0
        %v824 = vadd.f32 0.0, %v823
        %v825 = vpop.f32.mrb[0].mxu0
        %v826 = vadd.f32 0.0, %v825
        %v827 = vpop.f32.mrb[0].mxu0
        %v828 = vadd.f32 0.0, %v827
        %v829 = vpop.f32.mrb[0].mxu0
        %v830 = vadd.f32 0.0, %v829
        %831 = vdwg.mxu0
        %v832 = vmax.f32 %v794, %v804
        %v833 = vmax.f32 %v798, %v808
        %v834 = vmax.f32 %v832, %v814
        %v835 = vmax.f32 %v833, %v818
        %v836 = vmax.f32 %v834, %v824
        %v837 = vmax.f32 %v835, %v828
        %v838 = vmax.f32 %v836, %v837
        %v839 = vrot.slane %v838, 4
        %v840 = vmax.f32 %v838, %v839
        %v841 = vrot.slane %v840, 2
        %v842 = vmax.f32 %v840, %v841
        %v843 = vrot.slane %v842, 1
        %v844 = vmax.f32 %v842, %v843
        %v845 = vmax.f32 %v796, %v806
        %v846 = vmax.f32 %v800, %v810
        %v847 = vmax.f32 %v845, %v816
        %v848 = vmax.f32 %v846, %v820
        %v849 = vmax.f32 %v847, %v826
        %v850 = vmax.f32 %v848, %v830
        %v851 = vmax.f32 %v849, %v850
        %v852 = vrot.slane %v851, 4
        %v853 = vmax.f32 %v851, %v852
        %v854 = vrot.slane %v853, 2
        %v855 = vmax.f32 %v853, %v854
        %v856 = vrot.slane %v855, 1
        %v857 = vmax.f32 %v855, %v856
        %v858 = vsub.f32 %v794, %v844
        %v859 = vsub.f32 %v796, %v857
        %v860 = vsub.f32 %v798, %v844
        %v861 = vsub.f32 %v800, %v857
        %v862 = vsub.f32 %v804, %v844
        %v863 = vsub.f32 %v806, %v857
        %v864 = vsub.f32 %v808, %v844
        %v865 = vsub.f32 %v810, %v857
        %v866 = vsub.f32 %v814, %v844
        %v867 = vsub.f32 %v816, %v857
        %v868 = vsub.f32 %v818, %v844
        %v869 = vsub.f32 %v820, %v857
        %v870 = vsub.f32 %v824, %v844
        %v871 = vsub.f32 %v826, %v857
        %v872 = vsub.f32 %v828, %v844
        %v873 = vsub.f32 %v830, %v857
        %v874 = vmul.f32 %v858, 1.442695
        %v875 = vpow.pop %v874
        %v876 = vmul.f32 %v859, 1.442695
        %v877 = vpow.pop %v876
        %v878 = vmul.f32 %v860, 1.442695
        %v879 = vpow.pop %v878
        %v880 = vmul.f32 %v861, 1.442695
        %v881 = vpow.pop %v880
        %v882 = vmul.f32 %v862, 1.442695
        %v883 = vpow.pop %v882
        %v884 = vmul.f32 %v863, 1.442695
        %v885 = vpow.pop %v884
        %v886 = vmul.f32 %v864, 1.442695
        %v887 = vpow.pop %v886
        %v888 = vmul.f32 %v865, 1.442695
        %v889 = vpow.pop %v888
        %v890 = vmul.f32 %v866, 1.442695
        %v891 = vpow.pop %v890
        %v892 = vmul.f32 %v867, 1.442695
        %v893 = vpow.pop %v892
        %v894 = vmul.f32 %v868, 1.442695
        %v895 = vpow.pop %v894
        %v896 = vmul.f32 %v869, 1.442695
        %v897 = vpow.pop %v896
        %v898 = vmul.f32 %v870, 1.442695
        %v899 = vpow.pop %v898
        %v900 = vmul.f32 %v871, 1.442695
        %v901 = vpow.pop %v900
        %v902 = vmul.f32 %v872, 1.442695
        %v903 = vpow.pop %v902
        %v904 = vmul.f32 %v873, 1.442695
        %v905 = vpow.pop %v904
        %v906 = vadd.f32 %v875, %v879
        %v907 = vadd.f32 %v906, %v883
        %v908 = vadd.f32 %v907, %v887
        %v909 = vadd.f32 %v908, %v891
        %v910 = vadd.f32 %v909, %v895
        %v911 = vadd.f32 %v910, %v899
        %v912 = vadd.f32 %v911, %v903
        %v913 = vrot.slane %v912, 4
        %v914 = vadd.f32 %v912, %v913
        %v915 = vrot.slane %v914, 2
        %v916 = vadd.f32 %v914, %v915
        %v917 = vrot.slane %v916, 1
        %v918 = vadd.f32 %v916, %v917
        %v919 = vadd.f32 %v877, %v881
        %v920 = vadd.f32 %v919, %v885
        %v921 = vadd.f32 %v920, %v889
        %v922 = vadd.f32 %v921, %v893
        %v923 = vadd.f32 %v922, %v897
        %v924 = vadd.f32 %v923, %v901
        %v925 = vadd.f32 %v924, %v905
        %v926 = vrot.slane %v925, 4
        %v927 = vadd.f32 %v925, %v926
        %v928 = vrot.slane %v927, 2
        %v929 = vadd.f32 %v927, %v928
        %v930 = vrot.slane %v929, 1
        %v931 = vadd.f32 %v929, %v930
        %v932 = vrcp.pop %v918
        %v933 = vrcp.pop %v931
        %v934 = vmul.f32 %v875, %v932
        %v935 = vmul.f32 %v877, %v933
        %v936 = vmul.f32 %v879, %v932
        %v937 = vmul.f32 %v881, %v933
        %v938 = vmul.f32 %v883, %v932
        %v939 = vmul.f32 %v885, %v933
        %v940 = vmul.f32 %v887, %v932
        %v941 = vmul.f32 %v889, %v933
        %v942 = vmul.f32 %v891, %v932
        %v943 = vmul.f32 %v893, %v933
        %v944 = vmul.f32 %v895, %v932
        %v945 = vmul.f32 %v897, %v933
        %v946 = vmul.f32 %v899, %v932
        %v947 = vmul.f32 %v901, %v933
        %v948 = vmul.f32 %v903, %v932
        %v949 = vmul.f32 %v905, %v933
        loop: start=0, step=1, limit=6
        $region53: #{tpu_custom_call.1} parent=43 // loop_pre_header
          _
        $region54: #{tpu_custom_call.1} parent=43 // loop_header
          %s951 = sphi 0, %s955
          %p952 = scmp.ge.s32.totalorder %s951, 6
          %v956 = vphi %v747, %v1462
          %v957 = vphi %v748, %v1463
          %v958 = vphi %v749, %v1464
          %v959 = vphi %v750, %v1465
          %v960 = vphi %v751, %v1466
          %v961 = vphi %v752, %v1467
          %v962 = vphi %v753, %v1468
          %v963 = vphi %v754, %v1469
          %v964 = vphi %v934, %v1195
          %v965 = vphi %v935, %v1196
          %v966 = vphi %v936, %v1197
          %v967 = vphi %v937, %v1198
          %v968 = vphi %v938, %v1199
          %v969 = vphi %v939, %v1200
          %v970 = vphi %v940, %v1201
          %v971 = vphi %v941, %v1202
          %v972 = vphi %v942, %v1203
          %v973 = vphi %v943, %v1204
          %v974 = vphi %v944, %v1205
          %v975 = vphi %v945, %v1206
          %v976 = vphi %v946, %v1207
          %v977 = vphi %v947, %v1208
          %v978 = vphi %v948, %v1209
          %v979 = vphi %v949, %v1210
          %v980 = vphi %v794, %v1525
          %v981 = vphi %v796, %v1527
          %v982 = vphi %v798, %v1529
          %v983 = vphi %v800, %v1531
          %v984 = vphi %v804, %v1535
          %v985 = vphi %v806, %v1537
          %v986 = vphi %v808, %v1539
          %v987 = vphi %v810, %v1541
          %v988 = vphi %v814, %v1545
          %v989 = vphi %v816, %v1547
          %v990 = vphi %v818, %v1549
          %v991 = vphi %v820, %v1551
          %v992 = vphi %v824, %v1555
          %v993 = vphi %v826, %v1557
          %v994 = vphi %v828, %v1559
          %v995 = vphi %v830, %v1561
        $region55: #{tpu_custom_call.1} parent=43 // loop_header_branch
          %954 = sbr.rel (%p952) target = $region59
        $region56: #{tpu_custom_call.1} parent=43 // loop_body
          %v996 = vpack.c.bf16 %v957, %v956
          %v997 = vpack.c.bf16 %v959, %v958
          %v998 = vpack.c.bf16 %v961, %v960
          %v999 = vpack.c.bf16 %v963, %v962
          %1000 = vmatprep.subr.bf16.mxu0 0
          %1001 = vmatpush1.bf16.xpose.msra.mxu0 %v996
          %1002 = vmatprep.subr.bf16.mxu0 0
          %1003 = vmatpush1.bf16.xpose.msra.mxu0 %v997
          %1004 = vmatprep.subr.bf16.mxu0 0
          %1005 = vmatpush1.bf16.xpose.msra.mxu0 %v998
          %1006 = vmatprep.subr.bf16.mxu0 0
          %1007 = vmatpush1.bf16.xpose.msra.mxu0 %v999
          %1008 = vmatprep.subr.bf16.mxu0 0
          %1009 = vmatpush1.bf16.xpose.msra.mxu0 0
          %1010 = vmatprep.subr.bf16.mxu0 0
          %1011 = vmatpush1.bf16.xpose.msra.mxu0 0
          %1012 = vmatprep.subr.bf16.mxu0 0
          %1013 = vmatpush1.bf16.xpose.msra.mxu0 0
          %1014 = vmatprep.subr.bf16.mxu0 0
          %1015 = vmatpush1.bf16.xpose.msra.mxu0 0
          %1016 = vmatprep.subr.bf16.mxu0 0
          %1017 = vmatpush1.bf16.xpose.msra.mxu0 0
          %1018 = vmatprep.subr.bf16.mxu0 0
          %1019 = vmatpush1.bf16.xpose.msra.mxu0 0
          %1020 = vmatprep.subr.bf16.mxu0 0
          %1021 = vmatpush1.bf16.xpose.msra.mxu0 0
          %1022 = vmatprep.subr.bf16.mxu0 0
          %1023 = vmatpush1.bf16.xpose.msra.mxu0 0
          %1024 = vmatprep.subr.bf16.mxu0 0
          %1025 = vmatpush1.bf16.xpose.msra.mxu0 0
          %1026 = vmatprep.subr.bf16.mxu0 0
          %1027 = vmatpush1.bf16.xpose.msra.mxu0 0
          %1028 = vmatprep.subr.bf16.mxu0 0
          %1029 = vmatpush1.bf16.xpose.msra.mxu0 0
          %1030 = vmatprep.subr.bf16.mxu0 0
          %1031 = vmatpush1.bf16.xpose.msra.mxu0 0
          %1032 = vmatprep.mubr.bf16.mxu0 0
          %1033 = vmatmul.mubr.bf16.gmra.mrb[0].mxu0 %v996
          %v1034 = vpop.f32.mrb[0].mxu0
          %v1035 = vadd.f32 0.0, %v1034
          %v1036 = vpop.f32.mrb[0].mxu0
          %v1037 = vpop.f32.mrb[0].mxu0
          %v1038 = vadd.f32 0.0, %v1037
          %v1039 = vpop.f32.mrb[0].mxu0
          %1040 = vmatprep.mubr.bf16.mxu0 0
          %1041 = vmatmul.mubr.bf16.gmra.mrb[0].mxu0 %v997
          %v1042 = vpop.f32.mrb[0].mxu0
          %v1043 = vadd.f32 0.0, %v1042
          %v1044 = vpop.f32.mrb[0].mxu0
          %v1045 = vpop.f32.mrb[0].mxu0
          %v1046 = vadd.f32 0.0, %v1045
          %v1047 = vpop.f32.mrb[0].mxu0
          %1048 = vmatprep.mubr.bf16.mxu0 0
          %1049 = vmatmul.mubr.bf16.gmra.mrb[0].mxu0 %v998
          %v1050 = vpop.f32.mrb[0].mxu0
          %v1051 = vadd.f32 0.0, %v1050
          %v1052 = vpop.f32.mrb[0].mxu0
          %v1053 = vpop.f32.mrb[0].mxu0
          %v1054 = vadd.f32 0.0, %v1053
          %v1055 = vpop.f32.mrb[0].mxu0
          %1056 = vmatprep.mubr.bf16.mxu0 0
          %1057 = vmatmul.mubr.bf16.gmra.mrb[0].mxu0 %v999
          %v1058 = vpop.f32.mrb[0].mxu0
          %v1059 = vadd.f32 0.0, %v1058
          %v1060 = vpop.f32.mrb[0].mxu0
          %v1061 = vpop.f32.mrb[0].mxu0
          %v1062 = vadd.f32 0.0, %v1061
          %v1063 = vpop.f32.mrb[0].mxu0
          %1064 = vdwg.mxu0
          %v1065 = vpack.c.bf16 %v1038, %v1035
          %v1066 = vpack.c.bf16 %v1046, %v1043
          %v1067 = vpack.c.bf16 %v1054, %v1051
          %v1068 = vpack.c.bf16 %v1062, %v1059
          %v1069 = vpack.c.bf16 %v966, %v964
          %v1070 = vpack.c.bf16 %v967, %v965
          %v1071 = vpack.c.bf16 %v970, %v968
          %v1072 = vpack.c.bf16 %v971, %v969
          %v1073 = vpack.c.bf16 %v974, %v972
          %v1074 = vpack.c.bf16 %v975, %v973
          %v1075 = vpack.c.bf16 %v978, %v976
          %v1076 = vpack.c.bf16 %v979, %v977
          %v1077 = vmul.f32 %v964, %v980
          %v1078 = vmul.f32 %v965, %v981
          %v1079 = vmul.f32 %v966, %v982
          %v1080 = vmul.f32 %v967, %v983
          %v1081 = vmul.f32 %v968, %v984
          %v1082 = vmul.f32 %v969, %v985
          %v1083 = vmul.f32 %v970, %v986
          %v1084 = vmul.f32 %v971, %v987
          %v1085 = vmul.f32 %v972, %v988
          %v1086 = vmul.f32 %v973, %v989
          %v1087 = vmul.f32 %v974, %v990
          %v1088 = vmul.f32 %v975, %v991
          %v1089 = vmul.f32 %v976, %v992
          %v1090 = vmul.f32 %v977, %v993
          %v1091 = vmul.f32 %v978, %v994
          %v1092 = vmul.f32 %v979, %v995
          %vm1093 = vcmask 523264
          %v1095 = vsel %vm1093, %v1065, 0
          %v1098 = vsel %vm1093, %v1066, 0
          %v1101 = vsel %vm1093, %v1067, 0
          %v1104 = vsel %vm1093, %v1068, 0
          %1106 = vmatprep.subr.bf16.mxu0 %v1070
          %1107 = vmatpush1.bf16.msra.mxu0 %v1069
          %1108 = vmatprep.subr.bf16.mxu0 %v1072
          %1109 = vmatpush1.bf16.msra.mxu0 %v1071
          %1110 = vmatprep.subr.bf16.mxu0 %v1074
          %1111 = vmatpush1.bf16.msra.mxu0 %v1073
          %1112 = vmatprep.subr.bf16.mxu0 %v1076
          %1113 = vmatpush1.bf16.msra.mxu0 %v1075
          %1114 = vmatprep.subr.bf16.mxu0 0
          %1115 = vmatpush1.bf16.msra.mxu0 0
          %1116 = vmatprep.subr.bf16.mxu0 0
          %1117 = vmatpush1.bf16.msra.mxu0 0
          %1118 = vmatprep.subr.bf16.mxu0 0
          %1119 = vmatpush1.bf16.msra.mxu0 0
          %1120 = vmatprep.subr.bf16.mxu0 0
          %1121 = vmatpush1.bf16.msra.mxu0 0
          %1122 = vmatprep.subr.bf16.mxu0 0
          %1123 = vmatpush1.bf16.msra.mxu0 0
          %1124 = vmatprep.subr.bf16.mxu0 0
          %1125 = vmatpush1.bf16.msra.mxu0 0
          %1126 = vmatprep.subr.bf16.mxu0 0
          %1127 = vmatpush1.bf16.msra.mxu0 0
          %1128 = vmatprep.subr.bf16.mxu0 0
          %1129 = vmatpush1.bf16.msra.mxu0 0
          %1130 = vmatprep.subr.bf16.mxu0 0
          %1131 = vmatpush1.bf16.msra.mxu0 0
          %1132 = vmatprep.subr.bf16.mxu0 0
          %1133 = vmatpush1.bf16.msra.mxu0 0
          %1134 = vmatprep.subr.bf16.mxu0 0
          %1135 = vmatpush1.bf16.msra.mxu0 0
          %1136 = vmatprep.subr.bf16.mxu0 0
          %1137 = vmatpush1.bf16.msra.mxu0 0
          %1138 = vmatprep.mubr.bf16.mxu0 0
          %1139 = vmatmul.mubr.bf16.gmra.mrb[0].mxu0 %v1095
          %v1140 = vpop.f32.mrb[0].mxu0
          %v1141 = vadd.f32 1e-06, %v1140
          %v1142 = vpop.f32.mrb[0].mxu0
          %v1143 = vadd.f32 1e-06, %v1142
          %v1144 = vpop.f32.mrb[0].mxu0
          %v1145 = vadd.f32 1e-06, %v1144
          %v1146 = vpop.f32.mrb[0].mxu0
          %v1147 = vadd.f32 1e-06, %v1146
          %1148 = vmatprep.mubr.bf16.mxu0 0
          %1149 = vmatmul.mubr.bf16.gmra.mrb[0].mxu0 %v1098
          %v1150 = vpop.f32.mrb[0].mxu0
          %v1151 = vadd.f32 1e-06, %v1150
          %v1152 = vpop.f32.mrb[0].mxu0
          %v1153 = vadd.f32 1e-06, %v1152
          %v1154 = vpop.f32.mrb[0].mxu0
          %v1155 = vadd.f32 1e-06, %v1154
          %v1156 = vpop.f32.mrb[0].mxu0
          %v1157 = vadd.f32 1e-06, %v1156
          %1158 = vmatprep.mubr.bf16.mxu0 0
          %1159 = vmatmul.mubr.bf16.gmra.mrb[0].mxu0 %v1101
          %v1160 = vpop.f32.mrb[0].mxu0
          %v1161 = vadd.f32 1e-06, %v1160
          %v1162 = vpop.f32.mrb[0].mxu0
          %v1163 = vadd.f32 1e-06, %v1162
          %v1164 = vpop.f32.mrb[0].mxu0
          %v1165 = vadd.f32 1e-06, %v1164
          %v1166 = vpop.f32.mrb[0].mxu0
          %v1167 = vadd.f32 1e-06, %v1166
          %1168 = vmatprep.mubr.bf16.mxu0 0
          %1169 = vmatmul.mubr.bf16.gmra.mrb[0].mxu0 %v1104
          %v1170 = vpop.f32.mrb[0].mxu0
          %v1171 = vadd.f32 1e-06, %v1170
          %v1172 = vpop.f32.mrb[0].mxu0
          %v1173 = vadd.f32 1e-06, %v1172
          %v1174 = vpop.f32.mrb[0].mxu0
          %v1175 = vadd.f32 1e-06, %v1174
          %v1176 = vpop.f32.mrb[0].mxu0
          %v1177 = vadd.f32 1e-06, %v1176
          %1178 = vdwg.mxu0
          %v1179 = vrcp.pop %v1141
          %v1180 = vrcp.pop %v1143
          %v1181 = vrcp.pop %v1145
          %v1182 = vrcp.pop %v1147
          %v1183 = vrcp.pop %v1151
          %v1184 = vrcp.pop %v1153
          %v1185 = vrcp.pop %v1155
          %v1186 = vrcp.pop %v1157
          %v1187 = vrcp.pop %v1161
          %v1188 = vrcp.pop %v1163
          %v1189 = vrcp.pop %v1165
          %v1190 = vrcp.pop %v1167
          %v1191 = vrcp.pop %v1171
          %v1192 = vrcp.pop %v1173
          %v1193 = vrcp.pop %v1175
          %v1194 = vrcp.pop %v1177
          %v1195 = vmul.f32 %v1077, %v1179
          %v1196 = vmul.f32 %v1078, %v1180
          %v1197 = vmul.f32 %v1079, %v1181
          %v1198 = vmul.f32 %v1080, %v1182
          %v1199 = vmul.f32 %v1081, %v1183
          %v1200 = vmul.f32 %v1082, %v1184
          %v1201 = vmul.f32 %v1083, %v1185
          %v1202 = vmul.f32 %v1084, %v1186
          %v1203 = vmul.f32 %v1085, %v1187
          %v1204 = vmul.f32 %v1086, %v1188
          %v1205 = vmul.f32 %v1087, %v1189
          %v1206 = vmul.f32 %v1088, %v1190
          %v1207 = vmul.f32 %v1089, %v1191
          %v1208 = vmul.f32 %v1090, %v1192
          %v1209 = vmul.f32 %v1091, %v1193
          %v1210 = vmul.f32 %v1092, %v1194
          %v1211 = vpack.c.bf16 %v1197, %v1195
          %v1212 = vpack.c.bf16 %v1198, %v1196
          %v1213 = vpack.c.bf16 %v1201, %v1199
          %v1214 = vpack.c.bf16 %v1202, %v1200
          %v1215 = vpack.c.bf16 %v1205, %v1203
          %v1216 = vpack.c.bf16 %v1206, %v1204
          %v1217 = vpack.c.bf16 %v1209, %v1207
          %v1218 = vpack.c.bf16 %v1210, %v1208
          %v1219 = vld [vmem:[#allocation3] sm:$0xff]
          %v1220 = vld [vmem:[#allocation3 + $0x8] sm:$0xff]
          %v1221 = vld [vmem:[#allocation3 + $0x10] sm:$0xff]
          %v1222 = vld [vmem:[#allocation3 + $0x18] sm:$0xff]
          %v1223 = vld [vmem:[#allocation3 + $0x20] sm:$0xff]
          %v1224 = vld [vmem:[#allocation3 + $0x28] sm:$0xff]
          %v1225 = vld [vmem:[#allocation3 + $0x30] sm:$0xff]
          %v1226 = vld [vmem:[#allocation3 + $0x38] sm:$0xff]
          %v1227 = vld [vmem:[#allocation3 + $0x40] sm:$0xff]
          %v1228 = vld [vmem:[#allocation3 + $0x48] sm:$0xff]
          %v1229 = vld [vmem:[#allocation3 + $0x50] sm:$0xff]
          %v1230 = vld [vmem:[#allocation3 + $0x58] sm:$0xff]
          %v1231 = vld [vmem:[#allocation3 + $0x60] sm:$0xff]
          %v1232 = vld [vmem:[#allocation3 + $0x68] sm:$0xff]
          %v1233 = vld [vmem:[#allocation3 + $0x70] sm:$0xff]
          %v1234 = vld [vmem:[#allocation3 + $0x78] sm:$0xff]
          %1235 = vmatprep.subr.bf16.mxu0 0
          %1236 = vmatpush1.bf16.msra.mxu0 %v1219
          %1237 = vmatprep.subr.bf16.mxu0 0
          %1238 = vmatpush1.bf16.msra.mxu0 %v1220
          %1239 = vmatprep.subr.bf16.mxu0 0
          %1240 = vmatpush1.bf16.msra.mxu0 %v1221
          %1241 = vmatprep.subr.bf16.mxu0 0
          %1242 = vmatpush1.bf16.msra.mxu0 %v1222
          %1243 = vmatprep.subr.bf16.mxu0 0
          %1244 = vmatpush1.bf16.msra.mxu0 %v1223
          %1245 = vmatprep.subr.bf16.mxu0 0
          %1246 = vmatpush1.bf16.msra.mxu0 %v1224
          %1247 = vmatprep.subr.bf16.mxu0 0
          %1248 = vmatpush1.bf16.msra.mxu0 %v1225
          %1249 = vmatprep.subr.bf16.mxu0 0
          %1250 = vmatpush1.bf16.msra.mxu0 %v1226
          %1251 = vmatprep.subr.bf16.mxu0 0
          %1252 = vmatpush1.bf16.msra.mxu0 %v1227
          %1253 = vmatprep.subr.bf16.mxu0 0
          %1254 = vmatpush1.bf16.msra.mxu0 %v1228
          %1255 = vmatprep.subr.bf16.mxu0 0
          %1256 = vmatpush1.bf16.msra.mxu0 %v1229
          %1257 = vmatprep.subr.bf16.mxu0 0
          %1258 = vmatpush1.bf16.msra.mxu0 %v1230
          %1259 = vmatprep.subr.bf16.mxu0 0
          %1260 = vmatpush1.bf16.msra.mxu0 %v1231
          %1261 = vmatprep.subr.bf16.mxu0 0
          %1262 = vmatpush1.bf16.msra.mxu0 %v1232
          %1263 = vmatprep.subr.bf16.mxu0 0
          %1264 = vmatpush1.bf16.msra.mxu0 %v1233
          %1265 = vmatprep.subr.bf16.mxu0 0
          %1266 = vmatpush1.bf16.msra.mxu0 %v1234
          %1267 = vmatprep.mubr.bf16.mxu0 %v1212
          %1268 = vmatmul.mubr.bf16.gmra.mrb[0].mxu0 %v1211
          %v1269 = vpop.f32.mrb[0].mxu0
          %v1270 = vadd.f32 0.0, %v1269
          %v1271 = vpop.f32.mrb[0].mxu0
          %v1272 = vpop.f32.mrb[0].mxu0
          %v1273 = vadd.f32 0.0, %v1272
          %v1274 = vpop.f32.mrb[0].mxu0
          %1275 = vmatprep.mubr.bf16.mxu0 %v1214
          %1276 = vmatmul.mubr.bf16.gmra.mrb[0].mxu0 %v1213
          %v1277 = vpop.f32.mrb[0].mxu0
          %v1278 = vadd.f32 0.0, %v1277
          %v1279 = vpop.f32.mrb[0].mxu0
          %v1280 = vpop.f32.mrb[0].mxu0
          %v1281 = vadd.f32 0.0, %v1280
          %v1282 = vpop.f32.mrb[0].mxu0
          %1283 = vmatprep.mubr.bf16.mxu0 %v1216
          %1284 = vmatmul.mubr.bf16.gmra.mrb[0].mxu0 %v1215
          %v1285 = vpop.f32.mrb[0].mxu0
          %v1286 = vadd.f32 0.0, %v1285
          %v1287 = vpop.f32.mrb[0].mxu0
          %v1288 = vpop.f32.mrb[0].mxu0
          %v1289 = vadd.f32 0.0, %v1288
          %v1290 = vpop.f32.mrb[0].mxu0
          %1291 = vmatprep.mubr.bf16.mxu0 %v1218
          %1292 = vmatmul.mubr.bf16.gmra.mrb[0].mxu0 %v1217
          %v1293 = vpop.f32.mrb[0].mxu0
          %v1294 = vadd.f32 0.0, %v1293
          %v1295 = vpop.f32.mrb[0].mxu0
          %v1296 = vpop.f32.mrb[0].mxu0
          %v1297 = vadd.f32 0.0, %v1296
          %v1298 = vpop.f32.mrb[0].mxu0
          %1299 = vdwg.mxu0
          %1300 = vmatprep.subr.bf16.mxu0 %v1212
          %1301 = vmatpush1.bf16.xpose.msra.mxu0 %v1211
          %1302 = vmatprep.subr.bf16.mxu0 %v1214
          %1303 = vmatpush1.bf16.xpose.msra.mxu0 %v1213
          %1304 = vmatprep.subr.bf16.mxu0 %v1216
          %1305 = vmatpush1.bf16.xpose.msra.mxu0 %v1215
          %1306 = vmatprep.subr.bf16.mxu0 %v1218
          %1307 = vmatpush1.bf16.xpose.msra.mxu0 %v1217
          %1308 = vmatprep.subr.bf16.mxu0 0
          %1309 = vmatpush1.bf16.xpose.msra.mxu0 0
          %1310 = vmatprep.subr.bf16.mxu0 0
          %1311 = vmatpush1.bf16.xpose.msra.mxu0 0
          %1312 = vmatprep.subr.bf16.mxu0 0
          %1313 = vmatpush1.bf16.xpose.msra.mxu0 0
          %1314 = vmatprep.subr.bf16.mxu0 0
          %1315 = vmatpush1.bf16.xpose.msra.mxu0 0
          %1316 = vmatprep.subr.bf16.mxu0 0
          %1317 = vmatpush1.bf16.xpose.msra.mxu0 0
          %1318 = vmatprep.subr.bf16.mxu0 0
          %1319 = vmatpush1.bf16.xpose.msra.mxu0 0
          %1320 = vmatprep.subr.bf16.mxu0 0
          %1321 = vmatpush1.bf16.xpose.msra.mxu0 0
          %1322 = vmatprep.subr.bf16.mxu0 0
          %1323 = vmatpush1.bf16.xpose.msra.mxu0 0
          %1324 = vmatprep.subr.bf16.mxu0 0
          %1325 = vmatpush1.bf16.xpose.msra.mxu0 0
          %1326 = vmatprep.subr.bf16.mxu0 0
          %1327 = vmatpush1.bf16.xpose.msra.mxu0 0
          %1328 = vmatprep.subr.bf16.mxu0 0
          %1329 = vmatpush1.bf16.xpose.msra.mxu0 0
          %1330 = vmatprep.subr.bf16.mxu0 0
          %1331 = vmatpush1.bf16.xpose.msra.mxu0 0
          %1332 = vmatprep.mubr.bf16.mxu0 %v1212
          %1333 = vmatmul.mubr.bf16.gmra.mrb[0].mxu0 %v1211
          %v1334 = vpop.f32.mrb[0].mxu0
          %v1335 = vadd.f32 0.0, %v1334
          %v1336 = vpop.f32.mrb[0].mxu0
          %v1337 = vpop.f32.mrb[0].mxu0
          %v1338 = vadd.f32 0.0, %v1337
          %v1339 = vpop.f32.mrb[0].mxu0
          %1340 = vmatprep.mubr.bf16.mxu0 %v1214
          %1341 = vmatmul.mubr.bf16.gmra.mrb[0].mxu0 %v1213
          %v1342 = vpop.f32.mrb[0].mxu0
          %v1343 = vadd.f32 0.0, %v1342
          %v1344 = vpop.f32.mrb[0].mxu0
          %v1345 = vpop.f32.mrb[0].mxu0
          %v1346 = vadd.f32 0.0, %v1345
          %v1347 = vpop.f32.mrb[0].mxu0
          %1348 = vmatprep.mubr.bf16.mxu0 %v1216
          %1349 = vmatmul.mubr.bf16.gmra.mrb[0].mxu0 %v1215
          %v1350 = vpop.f32.mrb[0].mxu0
          %v1351 = vadd.f32 0.0, %v1350
          %v1352 = vpop.f32.mrb[0].mxu0
          %v1353 = vpop.f32.mrb[0].mxu0
          %v1354 = vadd.f32 0.0, %v1353
          %v1355 = vpop.f32.mrb[0].mxu0
          %1356 = vmatprep.mubr.bf16.mxu0 %v1218
          %1357 = vmatmul.mubr.bf16.gmra.mrb[0].mxu0 %v1217
          %v1358 = vpop.f32.mrb[0].mxu0
          %v1359 = vadd.f32 0.0, %v1358
          %v1360 = vpop.f32.mrb[0].mxu0
          %v1361 = vpop.f32.mrb[0].mxu0
          %v1362 = vadd.f32 0.0, %v1361
          %v1363 = vpop.f32.mrb[0].mxu0
          %1364 = vdwg.mxu0
          %v1365 = vpack.c.bf16 %v1338, %v1335
          %v1366 = vpack.c.bf16 %v1346, %v1343
          %v1367 = vpack.c.bf16 %v1354, %v1351
          %v1368 = vpack.c.bf16 %v1362, %v1359
          %v1369 = vmul.f32 %v956, %v1270
          %v1370 = vmul.f32 %v957, %v1273
          %v1371 = vmul.f32 %v958, %v1278
          %v1372 = vmul.f32 %v959, %v1281
          %v1373 = vmul.f32 %v960, %v1286
          %v1374 = vmul.f32 %v961, %v1289
          %v1375 = vmul.f32 %v962, %v1294
          %v1376 = vmul.f32 %v963, %v1297
          %v1378 = vsel %vm1093, %v1365, 0
          %v1381 = vsel %vm1093, %v1366, 0
          %v1384 = vsel %vm1093, %v1367, 0
          %v1387 = vsel %vm1093, %v1368, 0
          %1389 = vmatprep.subr.bf16.mxu0 0
          %1390 = vmatpush1.bf16.msra.mxu0 %v996
          %1391 = vmatprep.subr.bf16.mxu0 0
          %1392 = vmatpush1.bf16.msra.mxu0 %v997
          %1393 = vmatprep.subr.bf16.mxu0 0
          %1394 = vmatpush1.bf16.msra.mxu0 %v998
          %1395 = vmatprep.subr.bf16.mxu0 0
          %1396 = vmatpush1.bf16.msra.mxu0 %v999
          %1397 = vmatprep.subr.bf16.mxu0 0
          %1398 = vmatpush1.bf16.msra.mxu0 0
          %1399 = vmatprep.subr.bf16.mxu0 0
          %1400 = vmatpush1.bf16.msra.mxu0 0
          %1401 = vmatprep.subr.bf16.mxu0 0
          %1402 = vmatpush1.bf16.msra.mxu0 0
          %1403 = vmatprep.subr.bf16.mxu0 0
          %1404 = vmatpush1.bf16.msra.mxu0 0
          %1405 = vmatprep.subr.bf16.mxu0 0
          %1406 = vmatpush1.bf16.msra.mxu0 0
          %1407 = vmatprep.subr.bf16.mxu0 0
          %1408 = vmatpush1.bf16.msra.mxu0 0
          %1409 = vmatprep.subr.bf16.mxu0 0
          %1410 = vmatpush1.bf16.msra.mxu0 0
          %1411 = vmatprep.subr.bf16.mxu0 0
          %1412 = vmatpush1.bf16.msra.mxu0 0
          %1413 = vmatprep.subr.bf16.mxu0 0
          %1414 = vmatpush1.bf16.msra.mxu0 0
          %1415 = vmatprep.subr.bf16.mxu0 0
          %1416 = vmatpush1.bf16.msra.mxu0 0
          %1417 = vmatprep.subr.bf16.mxu0 0
          %1418 = vmatpush1.bf16.msra.mxu0 0
          %1419 = vmatprep.subr.bf16.mxu0 0
          %1420 = vmatpush1.bf16.msra.mxu0 0
          %1421 = vmatprep.mubr.bf16.mxu0 0
          %1422 = vmatmul.mubr.bf16.gmra.mrb[0].mxu0 %v1378
          %v1423 = vpop.f32.mrb[0].mxu0
          %v1424 = vadd.f32 1e-06, %v1423
          %v1425 = vpop.f32.mrb[0].mxu0
          %v1426 = vpop.f32.mrb[0].mxu0
          %v1427 = vadd.f32 1e-06, %v1426
          %v1428 = vpop.f32.mrb[0].mxu0
          %1429 = vmatprep.mubr.bf16.mxu0 0
          %1430 = vmatmul.mubr.bf16.gmra.mrb[0].mxu0 %v1381
          %v1431 = vpop.f32.mrb[0].mxu0
          %v1432 = vadd.f32 1e-06, %v1431
          %v1433 = vpop.f32.mrb[0].mxu0
          %v1434 = vpop.f32.mrb[0].mxu0
          %v1435 = vadd.f32 1e-06, %v1434
          %v1436 = vpop.f32.mrb[0].mxu0
          %1437 = vmatprep.mubr.bf16.mxu0 0
          %1438 = vmatmul.mubr.bf16.gmra.mrb[0].mxu0 %v1384
          %v1439 = vpop.f32.mrb[0].mxu0
          %v1440 = vadd.f32 1e-06, %v1439
          %v1441 = vpop.f32.mrb[0].mxu0
          %v1442 = vpop.f32.mrb[0].mxu0
          %v1443 = vadd.f32 1e-06, %v1442
          %v1444 = vpop.f32.mrb[0].mxu0
          %1445 = vmatprep.mubr.bf16.mxu0 0
          %1446 = vmatmul.mubr.bf16.gmra.mrb[0].mxu0 %v1387
          %v1447 = vpop.f32.mrb[0].mxu0
          %v1448 = vadd.f32 1e-06, %v1447
          %v1449 = vpop.f32.mrb[0].mxu0
          %v1450 = vpop.f32.mrb[0].mxu0
          %v1451 = vadd.f32 1e-06, %v1450
          %v1452 = vpop.f32.mrb[0].mxu0
          %1453 = vdwg.mxu0
          %v1454 = vrcp.pop %v1424
          %v1455 = vrcp.pop %v1427
          %v1456 = vrcp.pop %v1432
          %v1457 = vrcp.pop %v1435
          %v1458 = vrcp.pop %v1440
          %v1459 = vrcp.pop %v1443
          %v1460 = vrcp.pop %v1448
          %v1461 = vrcp.pop %v1451
          %v1462 = vmul.f32 %v1369, %v1454
          %v1463 = vmul.f32 %v1370, %v1455
          %v1464 = vmul.f32 %v1371, %v1456
          %v1465 = vmul.f32 %v1372, %v1457
          %v1466 = vmul.f32 %v1373, %v1458
          %v1467 = vmul.f32 %v1374, %v1459
          %v1468 = vmul.f32 %v1375, %v1460
          %v1469 = vmul.f32 %v1376, %v1461
          %v1470 = vpack.c.bf16 %v1463, %v1462
          %v1471 = vpack.c.bf16 %v1465, %v1464
          %v1472 = vpack.c.bf16 %v1467, %v1466
          %v1473 = vpack.c.bf16 %v1469, %v1468
          %v1474 = vld [vmem:[#allocation2] sm:$0xff]
          %v1475 = vld [vmem:[#allocation2 + $0x8] sm:$0xff]
          %v1476 = vld [vmem:[#allocation2 + $0x10] sm:$0xff]
          %v1477 = vld [vmem:[#allocation2 + $0x18] sm:$0xff]
          %v1478 = vld [vmem:[#allocation2 + $0x20] sm:$0xff]
          %v1479 = vld [vmem:[#allocation2 + $0x28] sm:$0xff]
          %v1480 = vld [vmem:[#allocation2 + $0x30] sm:$0xff]
          %v1481 = vld [vmem:[#allocation2 + $0x38] sm:$0xff]
          %v1482 = vld [vmem:[#allocation2 + $0x40] sm:$0xff]
          %v1483 = vld [vmem:[#allocation2 + $0x48] sm:$0xff]
          %v1484 = vld [vmem:[#allocation2 + $0x50] sm:$0xff]
          %v1485 = vld [vmem:[#allocation2 + $0x58] sm:$0xff]
          %v1486 = vld [vmem:[#allocation2 + $0x60] sm:$0xff]
          %v1487 = vld [vmem:[#allocation2 + $0x68] sm:$0xff]
          %v1488 = vld [vmem:[#allocation2 + $0x70] sm:$0xff]
          %v1489 = vld [vmem:[#allocation2 + $0x78] sm:$0xff]
          %1490 = vmatprep.subr.bf16.mxu0 %v1475
          %1491 = vmatpush1.bf16.msra.mxu0 %v1474
          %1492 = vmatprep.subr.bf16.mxu0 %v1477
          %1493 = vmatpush1.bf16.msra.mxu0 %v1476
          %1494 = vmatprep.subr.bf16.mxu0 %v1479
          %1495 = vmatpush1.bf16.msra.mxu0 %v1478
          %1496 = vmatprep.subr.bf16.mxu0 %v1481
          %1497 = vmatpush1.bf16.msra.mxu0 %v1480
          %1498 = vmatprep.subr.bf16.mxu0 %v1483
          %1499 = vmatpush1.bf16.msra.mxu0 %v1482
          %1500 = vmatprep.subr.bf16.mxu0 %v1485
          %1501 = vmatpush1.bf16.msra.mxu0 %v1484
          %1502 = vmatprep.subr.bf16.mxu0 %v1487
          %1503 = vmatpush1.bf16.msra.mxu0 %v1486
          %1504 = vmatprep.subr.bf16.mxu0 %v1489
          %1505 = vmatpush1.bf16.msra.mxu0 %v1488
          %1506 = vmatprep.subr.bf16.mxu0 0
          %1507 = vmatpush1.bf16.msra.mxu0 0
          %1508 = vmatprep.subr.bf16.mxu0 0
          %1509 = vmatpush1.bf16.msra.mxu0 0
          %1510 = vmatprep.subr.bf16.mxu0 0
          %1511 = vmatpush1.bf16.msra.mxu0 0
          %1512 = vmatprep.subr.bf16.mxu0 0
          %1513 = vmatpush1.bf16.msra.mxu0 0
          %1514 = vmatprep.subr.bf16.mxu0 0
          %1515 = vmatpush1.bf16.msra.mxu0 0
          %1516 = vmatprep.subr.bf16.mxu0 0
          %1517 = vmatpush1.bf16.msra.mxu0 0
          %1518 = vmatprep.subr.bf16.mxu0 0
          %1519 = vmatpush1.bf16.msra.mxu0 0
          %1520 = vmatprep.subr.bf16.mxu0 0
          %1521 = vmatpush1.bf16.msra.mxu0 0
          %1522 = vmatprep.mubr.bf16.mxu0 0
          %1523 = vmatmul.mubr.bf16.gmra.mrb[0].mxu0 %v1470
          %v1524 = vpop.f32.mrb[0].mxu0
          %v1525 = vadd.f32 0.0, %v1524
          %v1526 = vpop.f32.mrb[0].mxu0
          %v1527 = vadd.f32 0.0, %v1526
          %v1528 = vpop.f32.mrb[0].mxu0
          %v1529 = vadd.f32 0.0, %v1528
          %v1530 = vpop.f32.mrb[0].mxu0
          %v1531 = vadd.f32 0.0, %v1530
          %1532 = vmatprep.mubr.bf16.mxu0 0
          %1533 = vmatmul.mubr.bf16.gmra.mrb[0].mxu0 %v1471
          %v1534 = vpop.f32.mrb[0].mxu0
          %v1535 = vadd.f32 0.0, %v1534
          %v1536 = vpop.f32.mrb[0].mxu0
          %v1537 = vadd.f32 0.0, %v1536
          %v1538 = vpop.f32.mrb[0].mxu0
          %v1539 = vadd.f32 0.0, %v1538
          %v1540 = vpop.f32.mrb[0].mxu0
          %v1541 = vadd.f32 0.0, %v1540
          %1542 = vmatprep.mubr.bf16.mxu0 0
          %1543 = vmatmul.mubr.bf16.gmra.mrb[0].mxu0 %v1472
          %v1544 = vpop.f32.mrb[0].mxu0
          %v1545 = vadd.f32 0.0, %v1544
          %v1546 = vpop.f32.mrb[0].mxu0
          %v1547 = vadd.f32 0.0, %v1546
          %v1548 = vpop.f32.mrb[0].mxu0
          %v1549 = vadd.f32 0.0, %v1548
          %v1550 = vpop.f32.mrb[0].mxu0
          %v1551 = vadd.f32 0.0, %v1550
          %1552 = vmatprep.mubr.bf16.mxu0 0
          %1553 = vmatmul.mubr.bf16.gmra.mrb[0].mxu0 %v1473
          %v1554 = vpop.f32.mrb[0].mxu0
          %v1555 = vadd.f32 0.0, %v1554
          %v1556 = vpop.f32.mrb[0].mxu0
          %v1557 = vadd.f32 0.0, %v1556
          %v1558 = vpop.f32.mrb[0].mxu0
          %v1559 = vadd.f32 0.0, %v1558
          %v1560 = vpop.f32.mrb[0].mxu0
          %v1561 = vadd.f32 0.0, %v1560
          %1562 = vdwg.mxu0
        $region57: #{tpu_custom_call.1} parent=43 // loop_footer
          %s955 = sadd.s32 1, %s951
        $region58: #{tpu_custom_call.1} parent=43 // loop_footer_branch
          %950 = sbr.rel target = $region54
        $region59: #{tpu_custom_call.1} parent=43 // loop_exit
          _
        %v1563 = vpack.c.bf16 %v957, %v956
        %v1564 = vpack.c.bf16 %v959, %v958
        %v1565 = vpack.c.bf16 %v961, %v960
        %v1566 = vpack.c.bf16 %v963, %v962
        %1567 = vmatprep.subr.bf16.mxu0 0
        %1568 = vmatpush1.bf16.xpose.msra.mxu0 %v1563
        %1569 = vmatprep.subr.bf16.mxu0 0
        %1570 = vmatpush1.bf16.xpose.msra.mxu0 %v1564
        %1571 = vmatprep.subr.bf16.mxu0 0
        %1572 = vmatpush1.bf16.xpose.msra.mxu0 %v1565
        %1573 = vmatprep.subr.bf16.mxu0 0
        %1574 = vmatpush1.bf16.xpose.msra.mxu0 %v1566
        %1575 = vmatprep.subr.bf16.mxu0 0
        %1576 = vmatpush1.bf16.xpose.msra.mxu0 0
        %1577 = vmatprep.subr.bf16.mxu0 0
        %1578 = vmatpush1.bf16.xpose.msra.mxu0 0
        %1579 = vmatprep.subr.bf16.mxu0 0
        %1580 = vmatpush1.bf16.xpose.msra.mxu0 0
        %1581 = vmatprep.subr.bf16.mxu0 0
        %1582 = vmatpush1.bf16.xpose.msra.mxu0 0
        %1583 = vmatprep.subr.bf16.mxu0 0
        %1584 = vmatpush1.bf16.xpose.msra.mxu0 0
        %1585 = vmatprep.subr.bf16.mxu0 0
        %1586 = vmatpush1.bf16.xpose.msra.mxu0 0
        %1587 = vmatprep.subr.bf16.mxu0 0
        %1588 = vmatpush1.bf16.xpose.msra.mxu0 0
        %1589 = vmatprep.subr.bf16.mxu0 0
        %1590 = vmatpush1.bf16.xpose.msra.mxu0 0
        %1591 = vmatprep.subr.bf16.mxu0 0
        %1592 = vmatpush1.bf16.xpose.msra.mxu0 0
        %1593 = vmatprep.subr.bf16.mxu0 0
        %1594 = vmatpush1.bf16.xpose.msra.mxu0 0
        %1595 = vmatprep.subr.bf16.mxu0 0
        %1596 = vmatpush1.bf16.xpose.msra.mxu0 0
        %1597 = vmatprep.subr.bf16.mxu0 0
        %1598 = vmatpush1.bf16.xpose.msra.mxu0 0
        %1599 = vmatprep.mubr.bf16.mxu0 0
        %1600 = vmatmul.mubr.bf16.gmra.mrb[0].mxu0 %v1563
        %v1601 = vpop.f32.mrb[0].mxu0
        %v1602 = vadd.f32 0.0, %v1601
        %v1603 = vpop.f32.mrb[0].mxu0
        %v1604 = vpop.f32.mrb[0].mxu0
        %v1605 = vadd.f32 0.0, %v1604
        %v1606 = vpop.f32.mrb[0].mxu0
        %1607 = vmatprep.mubr.bf16.mxu0 0
        %1608 = vmatmul.mubr.bf16.gmra.mrb[0].mxu0 %v1564
        %v1609 = vpop.f32.mrb[0].mxu0
        %v1610 = vadd.f32 0.0, %v1609
        %v1611 = vpop.f32.mrb[0].mxu0
        %v1612 = vpop.f32.mrb[0].mxu0
        %v1613 = vadd.f32 0.0, %v1612
        %v1614 = vpop.f32.mrb[0].mxu0
        %1615 = vmatprep.mubr.bf16.mxu0 0
        %1616 = vmatmul.mubr.bf16.gmra.mrb[0].mxu0 %v1565
        %v1617 = vpop.f32.mrb[0].mxu0
        %v1618 = vadd.f32 0.0, %v1617
        %v1619 = vpop.f32.mrb[0].mxu0
        %v1620 = vpop.f32.mrb[0].mxu0
        %v1621 = vadd.f32 0.0, %v1620
        %v1622 = vpop.f32.mrb[0].mxu0
        %1623 = vmatprep.mubr.bf16.mxu0 0
        %1624 = vmatmul.mubr.bf16.gmra.mrb[0].mxu0 %v1566
        %v1625 = vpop.f32.mrb[0].mxu0
        %v1626 = vadd.f32 0.0, %v1625
        %v1627 = vpop.f32.mrb[0].mxu0
        %v1628 = vpop.f32.mrb[0].mxu0
        %v1629 = vadd.f32 0.0, %v1628
        %v1630 = vpop.f32.mrb[0].mxu0
        %1631 = vdwg.mxu0
        %v1632 = vpack.c.bf16 %v1605, %v1602
        %v1633 = vpack.c.bf16 %v1613, %v1610
        %v1634 = vpack.c.bf16 %v1621, %v1618
        %v1635 = vpack.c.bf16 %v1629, %v1626
        %v1636 = vpack.c.bf16 %v966, %v964
        %v1637 = vpack.c.bf16 %v967, %v965
        %v1638 = vpack.c.bf16 %v970, %v968
        %v1639 = vpack.c.bf16 %v971, %v969
        %v1640 = vpack.c.bf16 %v974, %v972
        %v1641 = vpack.c.bf16 %v975, %v973
        %v1642 = vpack.c.bf16 %v978, %v976
        %v1643 = vpack.c.bf16 %v979, %v977
        %v1644 = vmul.f32 %v964, %v980
        %v1645 = vmul.f32 %v965, %v981
        %v1646 = vmul.f32 %v966, %v982
        %v1647 = vmul.f32 %v967, %v983
        %v1648 = vmul.f32 %v968, %v984
        %v1649 = vmul.f32 %v969, %v985
        %v1650 = vmul.f32 %v970, %v986
        %v1651 = vmul.f32 %v971, %v987
        %v1652 = vmul.f32 %v972, %v988
        %v1653 = vmul.f32 %v973, %v989
        %v1654 = vmul.f32 %v974, %v990
        %v1655 = vmul.f32 %v975, %v991
        %v1656 = vmul.f32 %v976, %v992
        %v1657 = vmul.f32 %v977, %v993
        %v1658 = vmul.f32 %v978, %v994
        %v1659 = vmul.f32 %v979, %v995
        %vm1660 = vcmask 523264
        %v1662 = vsel %vm1660, %v1632, 0
        %v1665 = vsel %vm1660, %v1633, 0
        %v1668 = vsel %vm1660, %v1634, 0
        %v1671 = vsel %vm1660, %v1635, 0
        %1673 = vmatprep.subr.bf16.mxu0 %v1637
        %1674 = vmatpush1.bf16.msra.mxu0 %v1636
        %1675 = vmatprep.subr.bf16.mxu0 %v1639
        %1676 = vmatpush1.bf16.msra.mxu0 %v1638
        %1677 = vmatprep.subr.bf16.mxu0 %v1641
        %1678 = vmatpush1.bf16.msra.mxu0 %v1640
        %1679 = vmatprep.subr.bf16.mxu0 %v1643
        %1680 = vmatpush1.bf16.msra.mxu0 %v1642
        %1681 = vmatprep.subr.bf16.mxu0 0
        %1682 = vmatpush1.bf16.msra.mxu0 0
        %1683 = vmatprep.subr.bf16.mxu0 0
        %1684 = vmatpush1.bf16.msra.mxu0 0
        %1685 = vmatprep.subr.bf16.mxu0 0
        %1686 = vmatpush1.bf16.msra.mxu0 0
        %1687 = vmatprep.subr.bf16.mxu0 0
        %1688 = vmatpush1.bf16.msra.mxu0 0
        %1689 = vmatprep.subr.bf16.mxu0 0
        %1690 = vmatpush1.bf16.msra.mxu0 0
        %1691 = vmatprep.subr.bf16.mxu0 0
        %1692 = vmatpush1.bf16.msra.mxu0 0
        %1693 = vmatprep.subr.bf16.mxu0 0
        %1694 = vmatpush1.bf16.msra.mxu0 0
        %1695 = vmatprep.subr.bf16.mxu0 0
        %1696 = vmatpush1.bf16.msra.mxu0 0
        %1697 = vmatprep.subr.bf16.mxu0 0
        %1698 = vmatpush1.bf16.msra.mxu0 0
        %1699 = vmatprep.subr.bf16.mxu0 0
        %1700 = vmatpush1.bf16.msra.mxu0 0
        %1701 = vmatprep.subr.bf16.mxu0 0
        %1702 = vmatpush1.bf16.msra.mxu0 0
        %1703 = vmatprep.subr.bf16.mxu0 0
        %1704 = vmatpush1.bf16.msra.mxu0 0
        %1705 = vmatprep.mubr.bf16.mxu0 0
        %1706 = vmatmul.mubr.bf16.gmra.mrb[0].mxu0 %v1662
        %v1707 = vpop.f32.mrb[0].mxu0
        %v1708 = vadd.f32 1e-06, %v1707
        %v1709 = vpop.f32.mrb[0].mxu0
        %v1710 = vadd.f32 1e-06, %v1709
        %v1711 = vpop.f32.mrb[0].mxu0
        %v1712 = vadd.f32 1e-06, %v1711
        %v1713 = vpop.f32.mrb[0].mxu0
        %v1714 = vadd.f32 1e-06, %v1713
        %1715 = vmatprep.mubr.bf16.mxu0 0
        %1716 = vmatmul.mubr.bf16.gmra.mrb[0].mxu0 %v1665
        %v1717 = vpop.f32.mrb[0].mxu0
        %v1718 = vadd.f32 1e-06, %v1717
        %v1719 = vpop.f32.mrb[0].mxu0
        %v1720 = vadd.f32 1e-06, %v1719
        %v1721 = vpop.f32.mrb[0].mxu0
        %v1722 = vadd.f32 1e-06, %v1721
        %v1723 = vpop.f32.mrb[0].mxu0
        %v1724 = vadd.f32 1e-06, %v1723
        %1725 = vmatprep.mubr.bf16.mxu0 0
        %1726 = vmatmul.mubr.bf16.gmra.mrb[0].mxu0 %v1668
        %v1727 = vpop.f32.mrb[0].mxu0
        %v1728 = vadd.f32 1e-06, %v1727
        %v1729 = vpop.f32.mrb[0].mxu0
        %v1730 = vadd.f32 1e-06, %v1729
        %v1731 = vpop.f32.mrb[0].mxu0
        %v1732 = vadd.f32 1e-06, %v1731
        %v1733 = vpop.f32.mrb[0].mxu0
        %v1734 = vadd.f32 1e-06, %v1733
        %1735 = vmatprep.mubr.bf16.mxu0 0
        %1736 = vmatmul.mubr.bf16.gmra.mrb[0].mxu0 %v1671
        %v1737 = vpop.f32.mrb[0].mxu0
        %v1738 = vadd.f32 1e-06, %v1737
        %v1739 = vpop.f32.mrb[0].mxu0
        %v1740 = vadd.f32 1e-06, %v1739
        %v1741 = vpop.f32.mrb[0].mxu0
        %v1742 = vadd.f32 1e-06, %v1741
        %v1743 = vpop.f32.mrb[0].mxu0
        %v1744 = vadd.f32 1e-06, %v1743
        %1745 = vdwg.mxu0
        %v1746 = vrcp.pop %v1708
        %v1747 = vrcp.pop %v1710
        %v1748 = vrcp.pop %v1712
        %v1749 = vrcp.pop %v1714
        %v1750 = vrcp.pop %v1718
        %v1751 = vrcp.pop %v1720
        %v1752 = vrcp.pop %v1722
        %v1753 = vrcp.pop %v1724
        %v1754 = vrcp.pop %v1728
        %v1755 = vrcp.pop %v1730
        %v1756 = vrcp.pop %v1732
        %v1757 = vrcp.pop %v1734
        %v1758 = vrcp.pop %v1738
        %v1759 = vrcp.pop %v1740
        %v1760 = vrcp.pop %v1742
        %v1761 = vrcp.pop %v1744
        %v1762 = vmul.f32 %v1644, %v1746
        %v1763 = vmul.f32 %v1645, %v1747
        %v1764 = vmul.f32 %v1646, %v1748
        %v1765 = vmul.f32 %v1647, %v1749
        %v1766 = vmul.f32 %v1648, %v1750
        %v1767 = vmul.f32 %v1649, %v1751
        %v1768 = vmul.f32 %v1650, %v1752
        %v1769 = vmul.f32 %v1651, %v1753
        %v1770 = vmul.f32 %v1652, %v1754
        %v1771 = vmul.f32 %v1653, %v1755
        %v1772 = vmul.f32 %v1654, %v1756
        %v1773 = vmul.f32 %v1655, %v1757
        %v1774 = vmul.f32 %v1656, %v1758
        %v1775 = vmul.f32 %v1657, %v1759
        %v1776 = vmul.f32 %v1658, %v1760
        %v1777 = vmul.f32 %v1659, %v1761
        %v1778 = vpack.c.bf16 %v1764, %v1762
        %v1779 = vpack.c.bf16 %v1765, %v1763
        %v1780 = vpack.c.bf16 %v1768, %v1766
        %v1781 = vpack.c.bf16 %v1769, %v1767
        %v1782 = vpack.c.bf16 %v1772, %v1770
        %v1783 = vpack.c.bf16 %v1773, %v1771
        %v1784 = vpack.c.bf16 %v1776, %v1774
        %v1785 = vpack.c.bf16 %v1777, %v1775
        %1786 = vxpose.xlu0.c.b16.start [1/8] %v1563, 128
        %1787 = vxpose.xlu0.c.b16.cont [2/8] %v1564, 128
        %1788 = vxpose.xlu0.c.b16.cont [3/8] %v1565, 128
        %1789 = vxpose.xlu0.c.b16.cont [4/8] %v1566, 128
        %1790 = vxpose.xlu0.c.b16.cont [5/8] 0, 128
        %1791 = vxpose.xlu0.c.b16.cont [6/8] 0, 128
        %1792 = vxpose.xlu0.c.b16.cont [7/8] 0, 128
        %1793 = vxpose.xlu0.c.b16.end [8/8] 0, 128
        %v1794 = vpop.trf.xlu0
        %v1795 = vpop.trf.xlu0
        %v1796 = vpop.trf.xlu0
        %v1797 = vpop.trf.xlu0
        %v1798 = vpop.trf.xlu0
        %v1799 = vpop.trf.xlu0
        %v1800 = vpop.trf.xlu0
        %v1801 = vpop.trf.xlu0
        %v1803 = vsel %vm1660, %v1794, 0
        %v1806 = vsel %vm1660, %v1795, 0
        %v1809 = vsel %vm1660, %v1796, 0
        %v1812 = vsel %vm1660, %v1797, 0
        %v1815 = vsel %vm1660, %v1798, 0
        %v1818 = vsel %vm1660, %v1799, 0
        %v1821 = vsel %vm1660, %v1800, 0
        %v1824 = vsel %vm1660, %v1801, 0
        %1826 = vmatprep.subr.bf16.mxu0 %v1779
        %1827 = vmatpush1.bf16.msra.mxu0 %v1778
        %1828 = vmatprep.subr.bf16.mxu0 %v1781
        %1829 = vmatpush1.bf16.msra.mxu0 %v1780
        %1830 = vmatprep.subr.bf16.mxu0 %v1783
        %1831 = vmatpush1.bf16.msra.mxu0 %v1782
        %1832 = vmatprep.subr.bf16.mxu0 %v1785
        %1833 = vmatpush1.bf16.msra.mxu0 %v1784
        %1834 = vmatprep.subr.bf16.mxu0 0
        %1835 = vmatpush1.bf16.msra.mxu0 0
        %1836 = vmatprep.subr.bf16.mxu0 0
        %1837 = vmatpush1.bf16.msra.mxu0 0
        %1838 = vmatprep.subr.bf16.mxu0 0
        %1839 = vmatpush1.bf16.msra.mxu0 0
        %1840 = vmatprep.subr.bf16.mxu0 0
        %1841 = vmatpush1.bf16.msra.mxu0 0
        %1842 = vmatprep.subr.bf16.mxu0 0
        %1843 = vmatpush1.bf16.msra.mxu0 0
        %1844 = vmatprep.subr.bf16.mxu0 0
        %1845 = vmatpush1.bf16.msra.mxu0 0
        %1846 = vmatprep.subr.bf16.mxu0 0
        %1847 = vmatpush1.bf16.msra.mxu0 0
        %1848 = vmatprep.subr.bf16.mxu0 0
        %1849 = vmatpush1.bf16.msra.mxu0 0
        %1850 = vmatprep.subr.bf16.mxu0 0
        %1851 = vmatpush1.bf16.msra.mxu0 0
        %1852 = vmatprep.subr.bf16.mxu0 0
        %1853 = vmatpush1.bf16.msra.mxu0 0
        %1854 = vmatprep.subr.bf16.mxu0 0
        %1855 = vmatpush1.bf16.msra.mxu0 0
        %1856 = vmatprep.subr.bf16.mxu0 0
        %1857 = vmatpush1.bf16.msra.mxu0 0
        %1858 = vmatprep.mubr.bf16.mxu0 0
        %1859 = vmatmul.mubr.bf16.gmra.mrb[0].mxu0 %v1803
        %v1860 = vpop.f32.mrb[0].mxu0
        %v1861 = vadd.f32 0.0, %v1860
        %v1862 = vpop.f32.mrb[0].mxu0
        %v1863 = vadd.f32 0.0, %v1862
        %v1864 = vpop.f32.mrb[0].mxu0
        %v1865 = vadd.f32 0.0, %v1864
        %v1866 = vpop.f32.mrb[0].mxu0
        %v1867 = vadd.f32 0.0, %v1866
        %1868 = vmatprep.mubr.bf16.mxu0 0
        %1869 = vmatmul.mubr.bf16.gmra.mrb[0].mxu0 %v1806
        %v1870 = vpop.f32.mrb[0].mxu0
        %v1871 = vadd.f32 0.0, %v1870
        %v1872 = vpop.f32.mrb[0].mxu0
        %v1873 = vadd.f32 0.0, %v1872
        %v1874 = vpop.f32.mrb[0].mxu0
        %v1875 = vadd.f32 0.0, %v1874
        %v1876 = vpop.f32.mrb[0].mxu0
        %v1877 = vadd.f32 0.0, %v1876
        %1878 = vmatprep.mubr.bf16.mxu0 0
        %1879 = vmatmul.mubr.bf16.gmra.mrb[0].mxu0 %v1809
        %v1880 = vpop.f32.mrb[0].mxu0
        %v1881 = vadd.f32 0.0, %v1880
        %v1882 = vpop.f32.mrb[0].mxu0
        %v1883 = vadd.f32 0.0, %v1882
        %v1884 = vpop.f32.mrb[0].mxu0
        %v1885 = vadd.f32 0.0, %v1884
        %v1886 = vpop.f32.mrb[0].mxu0
        %v1887 = vadd.f32 0.0, %v1886
        %1888 = vmatprep.mubr.bf16.mxu0 0
        %1889 = vmatmul.mubr.bf16.gmra.mrb[0].mxu0 %v1812
        %v1890 = vpop.f32.mrb[0].mxu0
        %v1891 = vadd.f32 0.0, %v1890
        %v1892 = vpop.f32.mrb[0].mxu0
        %v1893 = vadd.f32 0.0, %v1892
        %v1894 = vpop.f32.mrb[0].mxu0
        %v1895 = vadd.f32 0.0, %v1894
        %v1896 = vpop.f32.mrb[0].mxu0
        %v1897 = vadd.f32 0.0, %v1896
        %1898 = vmatprep.mubr.bf16.mxu0 0
        %1899 = vmatmul.mubr.bf16.gmra.mrb[0].mxu0 %v1815
        %v1900 = vpop.f32.mrb[0].mxu0
        %v1901 = vadd.f32 0.0, %v1900
        %v1902 = vpop.f32.mrb[0].mxu0
        %v1903 = vadd.f32 0.0, %v1902
        %v1904 = vpop.f32.mrb[0].mxu0
        %v1905 = vadd.f32 0.0, %v1904
        %v1906 = vpop.f32.mrb[0].mxu0
        %v1907 = vadd.f32 0.0, %v1906
        %1908 = vmatprep.mubr.bf16.mxu0 0
        %1909 = vmatmul.mubr.bf16.gmra.mrb[0].mxu0 %v1818
        %v1910 = vpop.f32.mrb[0].mxu0
        %v1911 = vadd.f32 0.0, %v1910
        %v1912 = vpop.f32.mrb[0].mxu0
        %v1913 = vadd.f32 0.0, %v1912
        %v1914 = vpop.f32.mrb[0].mxu0
        %v1915 = vadd.f32 0.0, %v1914
        %v1916 = vpop.f32.mrb[0].mxu0
        %v1917 = vadd.f32 0.0, %v1916
        %1918 = vmatprep.mubr.bf16.mxu0 0
        %1919 = vmatmul.mubr.bf16.gmra.mrb[0].mxu0 %v1821
        %v1920 = vpop.f32.mrb[0].mxu0
        %v1921 = vadd.f32 0.0, %v1920
        %v1922 = vpop.f32.mrb[0].mxu0
        %v1923 = vadd.f32 0.0, %v1922
        %v1924 = vpop.f32.mrb[0].mxu0
        %v1925 = vadd.f32 0.0, %v1924
        %v1926 = vpop.f32.mrb[0].mxu0
        %v1927 = vadd.f32 0.0, %v1926
        %1928 = vmatprep.mubr.bf16.mxu0 0
        %1929 = vmatmul.mubr.bf16.gmra.mrb[0].mxu0 %v1824
        %v1930 = vpop.f32.mrb[0].mxu0
        %v1931 = vadd.f32 0.0, %v1930
        %v1932 = vpop.f32.mrb[0].mxu0
        %v1933 = vadd.f32 0.0, %v1932
        %v1934 = vpop.f32.mrb[0].mxu0
        %v1935 = vadd.f32 0.0, %v1934
        %v1936 = vpop.f32.mrb[0].mxu0
        %v1937 = vadd.f32 0.0, %v1936
        %1938 = vdwg.mxu0
        %v1939 = vld [vmem:[#allocation7] sm:$0xff]
        %v1940 = vld [vmem:[#allocation7 + $0x8] sm:$0xff]
        %v1941 = vld [vmem:[#allocation7 + $0x10] sm:$0xff]
        %v1942 = vld [vmem:[#allocation7 + $0x18] sm:$0xff]
        %v1943 = vld [vmem:[#allocation7 + $0x20] sm:$0xff]
        %v1944 = vld [vmem:[#allocation7 + $0x28] sm:$0xff]
        %v1945 = vld [vmem:[#allocation7 + $0x30] sm:$0xff]
        %v1946 = vld [vmem:[#allocation7 + $0x38] sm:$0xff]
        %v1947 = vld [vmem:[#allocation7 + $0x40] sm:$0xff]
        %v1948 = vld [vmem:[#allocation7 + $0x48] sm:$0xff]
        %v1949 = vld [vmem:[#allocation7 + $0x50] sm:$0xff]
        %v1950 = vld [vmem:[#allocation7 + $0x58] sm:$0xff]
        %v1951 = vld [vmem:[#allocation7 + $0x60] sm:$0xff]
        %v1952 = vld [vmem:[#allocation7 + $0x68] sm:$0xff]
        %v1953 = vld [vmem:[#allocation7 + $0x70] sm:$0xff]
        %v1954 = vld [vmem:[#allocation7 + $0x78] sm:$0xff]
        %v1955 = vpack.c.bf16 %v1940, %v1939
        %v1956 = vpack.c.bf16 %v1942, %v1941
        %v1957 = vpack.c.bf16 %v1944, %v1943
        %v1958 = vpack.c.bf16 %v1946, %v1945
        %v1959 = vpack.c.bf16 %v1948, %v1947
        %v1960 = vpack.c.bf16 %v1950, %v1949
        %v1961 = vpack.c.bf16 %v1952, %v1951
        %v1962 = vpack.c.bf16 %v1954, %v1953
        %v1963 = vpack.c.bf16 %v1865, %v1861
        %v1964 = vpack.c.bf16 %v1867, %v1863
        %v1965 = vpack.c.bf16 %v1875, %v1871
        %v1966 = vpack.c.bf16 %v1877, %v1873
        %v1967 = vpack.c.bf16 %v1885, %v1881
        %v1968 = vpack.c.bf16 %v1887, %v1883
        %v1969 = vpack.c.bf16 %v1895, %v1891
        %v1970 = vpack.c.bf16 %v1897, %v1893
        %v1971 = vpack.c.bf16 %v1905, %v1901
        %v1972 = vpack.c.bf16 %v1907, %v1903
        %v1973 = vpack.c.bf16 %v1915, %v1911
        %v1974 = vpack.c.bf16 %v1917, %v1913
        %v1975 = vpack.c.bf16 %v1925, %v1921
        %v1976 = vpack.c.bf16 %v1927, %v1923
        %v1977 = vpack.c.bf16 %v1935, %v1931
        %v1978 = vpack.c.bf16 %v1937, %v1933
        %v1979 = vld [vmem:[%s5] sm:$0xff]
        %v1980 = vld [vmem:[%s5 + $0x8] sm:$0xff]
        %v1981 = vld [vmem:[%s5 + $0x10] sm:$0xff]
        %v1982 = vld [vmem:[%s5 + $0x18] sm:$0xff]
        %v1983 = vld [vmem:[%s5 + $0x20] sm:$0xff]
        %v1984 = vld [vmem:[%s5 + $0x28] sm:$0xff]
        %v1985 = vld [vmem:[%s5 + $0x30] sm:$0xff]
        %v1986 = vld [vmem:[%s5 + $0x38] sm:$0xff]
        %v1987 = vld [vmem:[%s5 + $0x40] sm:$0xff]
        %v1988 = vld [vmem:[%s5 + $0x48] sm:$0xff]
        %v1989 = vld [vmem:[%s5 + $0x50] sm:$0xff]
        %v1990 = vld [vmem:[%s5 + $0x58] sm:$0xff]
        %v1991 = vld [vmem:[%s5 + $0x60] sm:$0xff]
        %v1992 = vld [vmem:[%s5 + $0x68] sm:$0xff]
        %v1993 = vld [vmem:[%s5 + $0x70] sm:$0xff]
        %v1994 = vld [vmem:[%s5 + $0x78] sm:$0xff]
        %1996 = vset.pattern.permute.xlu0 0
        %1997 = vperm.xlu0 %1996, %v1979
        %v1998 = vpop.permute.xlu0 %1997
        %2001 = vset.pattern.permute.xlu0 0
        %2002 = vperm.xlu0 %2001, %v1980
        %v2003 = vpop.permute.xlu0 %2002
        %2006 = vset.pattern.permute.xlu0 0
        %2007 = vperm.xlu0 %2006, %v1981
        %v2008 = vpop.permute.xlu0 %2007
        %2011 = vset.pattern.permute.xlu0 0
        %2012 = vperm.xlu0 %2011, %v1982
        %v2013 = vpop.permute.xlu0 %2012
        %2016 = vset.pattern.permute.xlu0 0
        %2017 = vperm.xlu0 %2016, %v1983
        %v2018 = vpop.permute.xlu0 %2017
        %2021 = vset.pattern.permute.xlu0 0
        %2022 = vperm.xlu0 %2021, %v1984
        %v2023 = vpop.permute.xlu0 %2022
        %2026 = vset.pattern.permute.xlu0 0
        %2027 = vperm.xlu0 %2026, %v1985
        %v2028 = vpop.permute.xlu0 %2027
        %2031 = vset.pattern.permute.xlu0 0
        %2032 = vperm.xlu0 %2031, %v1986
        %v2033 = vpop.permute.xlu0 %2032
        %2036 = vset.pattern.permute.xlu0 0
        %2037 = vperm.xlu0 %2036, %v1987
        %v2038 = vpop.permute.xlu0 %2037
        %2041 = vset.pattern.permute.xlu0 0
        %2042 = vperm.xlu0 %2041, %v1988
        %v2043 = vpop.permute.xlu0 %2042
        %2046 = vset.pattern.permute.xlu0 0
        %2047 = vperm.xlu0 %2046, %v1989
        %v2048 = vpop.permute.xlu0 %2047
        %2051 = vset.pattern.permute.xlu0 0
        %2052 = vperm.xlu0 %2051, %v1990
        %v2053 = vpop.permute.xlu0 %2052
        %2056 = vset.pattern.permute.xlu0 0
        %2057 = vperm.xlu0 %2056, %v1991
        %v2058 = vpop.permute.xlu0 %2057
        %2061 = vset.pattern.permute.xlu0 0
        %2062 = vperm.xlu0 %2061, %v1992
        %v2063 = vpop.permute.xlu0 %2062
        %2066 = vset.pattern.permute.xlu0 0
        %2067 = vperm.xlu0 %2066, %v1993
        %v2068 = vpop.permute.xlu0 %2067
        %2071 = vset.pattern.permute.xlu0 0
        %2072 = vperm.xlu0 %2071, %v1994
        %v2073 = vpop.permute.xlu0 %2072
        %2075 = vmatprep.subr.bf16.mxu0 %v1964
        %2076 = vmatpush1.bf16.msra.mxu0 %v1963
        %2077 = vmatprep.subr.bf16.mxu0 %v1966
        %2078 = vmatpush1.bf16.msra.mxu0 %v1965
        %2079 = vmatprep.subr.bf16.mxu0 %v1968
        %2080 = vmatpush1.bf16.msra.mxu0 %v1967
        %2081 = vmatprep.subr.bf16.mxu0 %v1970
        %2082 = vmatpush1.bf16.msra.mxu0 %v1969
        %2083 = vmatprep.subr.bf16.mxu0 %v1972
        %2084 = vmatpush1.bf16.msra.mxu0 %v1971
        %2085 = vmatprep.subr.bf16.mxu0 %v1974
        %2086 = vmatpush1.bf16.msra.mxu0 %v1973
        %2087 = vmatprep.subr.bf16.mxu0 %v1976
        %2088 = vmatpush1.bf16.msra.mxu0 %v1975
        %2089 = vmatprep.subr.bf16.mxu0 %v1978
        %2090 = vmatpush1.bf16.msra.mxu0 %v1977
        %2091 = vmatprep.subr.bf16.mxu0 0
        %2092 = vmatpush1.bf16.msra.mxu0 0
        %2093 = vmatprep.subr.bf16.mxu0 0
        %2094 = vmatpush1.bf16.msra.mxu0 0
        %2095 = vmatprep.subr.bf16.mxu0 0
        %2096 = vmatpush1.bf16.msra.mxu0 0
        %2097 = vmatprep.subr.bf16.mxu0 0
        %2098 = vmatpush1.bf16.msra.mxu0 0
        %2099 = vmatprep.subr.bf16.mxu0 0
        %2100 = vmatpush1.bf16.msra.mxu0 0
        %2101 = vmatprep.subr.bf16.mxu0 0
        %2102 = vmatpush1.bf16.msra.mxu0 0
        %2103 = vmatprep.subr.bf16.mxu0 0
        %2104 = vmatpush1.bf16.msra.mxu0 0
        %2105 = vmatprep.subr.bf16.mxu0 0
        %2106 = vmatpush1.bf16.msra.mxu0 0
        %2107 = vmatprep.mubr.bf16.mxu0 0
        %2108 = vmatmul.mubr.bf16.gmra.mrb[0].mxu0 %v1955
        %v2109 = vpop.f32.mrb[0].mxu0
        %v2110 = vadd.f32 %v1998, %v2109
        %v2111 = vpop.f32.mrb[0].mxu0
        %v2112 = vadd.f32 %v1998, %v2111
        %v2113 = vpop.f32.mrb[0].mxu0
        %v2114 = vadd.f32 %v2003, %v2113
        %v2115 = vpop.f32.mrb[0].mxu0
        %v2116 = vadd.f32 %v2003, %v2115
        %2117 = vmatprep.mubr.bf16.mxu0 0
        %2118 = vmatmul.mubr.bf16.gmra.mrb[0].mxu0 %v1956
        %v2119 = vpop.f32.mrb[0].mxu0
        %v2120 = vadd.f32 %v2008, %v2119
        %v2121 = vpop.f32.mrb[0].mxu0
        %v2122 = vadd.f32 %v2008, %v2121
        %v2123 = vpop.f32.mrb[0].mxu0
        %v2124 = vadd.f32 %v2013, %v2123
        %v2125 = vpop.f32.mrb[0].mxu0
        %v2126 = vadd.f32 %v2013, %v2125
        %2127 = vmatprep.mubr.bf16.mxu0 0
        %2128 = vmatmul.mubr.bf16.gmra.mrb[0].mxu0 %v1957
        %v2129 = vpop.f32.mrb[0].mxu0
        %v2130 = vadd.f32 %v2018, %v2129
        %v2131 = vpop.f32.mrb[0].mxu0
        %v2132 = vadd.f32 %v2018, %v2131
        %v2133 = vpop.f32.mrb[0].mxu0
        %v2134 = vadd.f32 %v2023, %v2133
        %v2135 = vpop.f32.mrb[0].mxu0
        %v2136 = vadd.f32 %v2023, %v2135
        %2137 = vmatprep.mubr.bf16.mxu0 0
        %2138 = vmatmul.mubr.bf16.gmra.mrb[0].mxu0 %v1958
        %v2139 = vpop.f32.mrb[0].mxu0
        %v2140 = vadd.f32 %v2028, %v2139
        %v2141 = vpop.f32.mrb[0].mxu0
        %v2142 = vadd.f32 %v2028, %v2141
        %v2143 = vpop.f32.mrb[0].mxu0
        %v2144 = vadd.f32 %v2033, %v2143
        %v2145 = vpop.f32.mrb[0].mxu0
        %v2146 = vadd.f32 %v2033, %v2145
        %2147 = vmatprep.mubr.bf16.mxu0 0
        %2148 = vmatmul.mubr.bf16.gmra.mrb[0].mxu0 %v1959
        %v2149 = vpop.f32.mrb[0].mxu0
        %v2150 = vadd.f32 %v2038, %v2149
        %v2151 = vpop.f32.mrb[0].mxu0
        %v2152 = vadd.f32 %v2038, %v2151
        %v2153 = vpop.f32.mrb[0].mxu0
        %v2154 = vadd.f32 %v2043, %v2153
        %v2155 = vpop.f32.mrb[0].mxu0
        %v2156 = vadd.f32 %v2043, %v2155
        %2157 = vmatprep.mubr.bf16.mxu0 0
        %2158 = vmatmul.mubr.bf16.gmra.mrb[0].mxu0 %v1960
        %v2159 = vpop.f32.mrb[0].mxu0
        %v2160 = vadd.f32 %v2048, %v2159
        %v2161 = vpop.f32.mrb[0].mxu0
        %v2162 = vadd.f32 %v2048, %v2161
        %v2163 = vpop.f32.mrb[0].mxu0
        %v2164 = vadd.f32 %v2053, %v2163
        %v2165 = vpop.f32.mrb[0].mxu0
        %v2166 = vadd.f32 %v2053, %v2165
        %2167 = vmatprep.mubr.bf16.mxu0 0
        %2168 = vmatmul.mubr.bf16.gmra.mrb[0].mxu0 %v1961
        %v2169 = vpop.f32.mrb[0].mxu0
        %v2170 = vadd.f32 %v2058, %v2169
        %v2171 = vpop.f32.mrb[0].mxu0
        %v2172 = vadd.f32 %v2058, %v2171
        %v2173 = vpop.f32.mrb[0].mxu0
        %v2174 = vadd.f32 %v2063, %v2173
        %v2175 = vpop.f32.mrb[0].mxu0
        %v2176 = vadd.f32 %v2063, %v2175
        %2177 = vmatprep.mubr.bf16.mxu0 0
        %2178 = vmatmul.mubr.bf16.gmra.mrb[0].mxu0 %v1962
        %v2179 = vpop.f32.mrb[0].mxu0
        %v2180 = vadd.f32 %v2068, %v2179
        %v2181 = vpop.f32.mrb[0].mxu0
        %v2182 = vadd.f32 %v2068, %v2181
        %v2183 = vpop.f32.mrb[0].mxu0
        %v2184 = vadd.f32 %v2073, %v2183
        %v2185 = vpop.f32.mrb[0].mxu0
        %v2186 = vadd.f32 %v2073, %v2185
        %2187 = vdwg.mxu0
        %v2188 = vld [vmem:[%s262] sm:$0xff]
        %v2189 = vld [vmem:[%s262 + $0x8] sm:$0xff]
        %v2190 = vld [vmem:[%s262 + $0x10] sm:$0xff]
        %v2191 = vld [vmem:[%s262 + $0x18] sm:$0xff]
        %v2192 = vld [vmem:[%s262 + $0x20] sm:$0xff]
        %v2193 = vld [vmem:[%s262 + $0x28] sm:$0xff]
        %v2194 = vld [vmem:[%s262 + $0x30] sm:$0xff]
        %v2195 = vld [vmem:[%s262 + $0x38] sm:$0xff]
        %v2196 = vld [vmem:[%s262 + $0x40] sm:$0xff]
        %v2197 = vld [vmem:[%s262 + $0x48] sm:$0xff]
        %v2198 = vld [vmem:[%s262 + $0x50] sm:$0xff]
        %v2199 = vld [vmem:[%s262 + $0x58] sm:$0xff]
        %v2200 = vld [vmem:[%s262 + $0x60] sm:$0xff]
        %v2201 = vld [vmem:[%s262 + $0x68] sm:$0xff]
        %v2202 = vld [vmem:[%s262 + $0x70] sm:$0xff]
        %v2203 = vld [vmem:[%s262 + $0x78] sm:$0xff]
        %v2204 = vld [vmem:[%s262 + $0x80] sm:$0xff]
        %v2205 = vld [vmem:[%s262 + $0x88] sm:$0xff]
        %v2206 = vld [vmem:[%s262 + $0x90] sm:$0xff]
        %v2207 = vld [vmem:[%s262 + $0x98] sm:$0xff]
        %v2208 = vld [vmem:[%s262 + $0xa0] sm:$0xff]
        %v2209 = vld [vmem:[%s262 + $0xa8] sm:$0xff]
        %v2210 = vld [vmem:[%s262 + $0xb0] sm:$0xff]
        %v2211 = vld [vmem:[%s262 + $0xb8] sm:$0xff]
        %v2212 = vld [vmem:[%s262 + $0xc0] sm:$0xff]
        %v2213 = vld [vmem:[%s262 + $0xc8] sm:$0xff]
        %v2214 = vld [vmem:[%s262 + $0xd0] sm:$0xff]
        %v2215 = vld [vmem:[%s262 + $0xd8] sm:$0xff]
        %v2216 = vld [vmem:[%s262 + $0xe0] sm:$0xff]
        %v2217 = vld [vmem:[%s262 + $0xe8] sm:$0xff]
        %v2218 = vld [vmem:[%s262 + $0xf0] sm:$0xff]
        %v2219 = vld [vmem:[%s262 + $0xf8] sm:$0xff]
        %v2220 = vadd.f32 %v2188, %v2110
        %v2221 = vadd.f32 %v2189, %v2112
        %v2222 = vadd.f32 %v2190, %v2114
        %v2223 = vadd.f32 %v2191, %v2116
        %v2224 = vadd.f32 %v2192, %v2120
        %v2225 = vadd.f32 %v2193, %v2122
        %v2226 = vadd.f32 %v2194, %v2124
        %v2227 = vadd.f32 %v2195, %v2126
        %v2228 = vadd.f32 %v2196, %v2130
        %v2229 = vadd.f32 %v2197, %v2132
        %v2230 = vadd.f32 %v2198, %v2134
        %v2231 = vadd.f32 %v2199, %v2136
        %v2232 = vadd.f32 %v2200, %v2140
        %v2233 = vadd.f32 %v2201, %v2142
        %v2234 = vadd.f32 %v2202, %v2144
        %v2235 = vadd.f32 %v2203, %v2146
        %v2236 = vadd.f32 %v2204, %v2150
        %v2237 = vadd.f32 %v2205, %v2152
        %v2238 = vadd.f32 %v2206, %v2154
        %v2239 = vadd.f32 %v2207, %v2156
        %v2240 = vadd.f32 %v2208, %v2160
        %v2241 = vadd.f32 %v2209, %v2162
        %v2242 = vadd.f32 %v2210, %v2164
        %v2243 = vadd.f32 %v2211, %v2166
        %v2244 = vadd.f32 %v2212, %v2170
        %v2245 = vadd.f32 %v2213, %v2172
        %v2246 = vadd.f32 %v2214, %v2174
        %v2247 = vadd.f32 %v2215, %v2176
        %v2248 = vadd.f32 %v2216, %v2180
        %v2249 = vadd.f32 %v2217, %v2182
        %v2250 = vadd.f32 %v2218, %v2184
        %v2251 = vadd.f32 %v2219, %v2186
        %v2252 = vmax.f32 %v2220, 0.0
        %v2253 = vmax.f32 %v2221, 0.0
        %v2254 = vmax.f32 %v2222, 0.0
        %v2255 = vmax.f32 %v2223, 0.0
        %v2256 = vmax.f32 %v2224, 0.0
        %v2257 = vmax.f32 %v2225, 0.0
        %v2258 = vmax.f32 %v2226, 0.0
        %v2259 = vmax.f32 %v2227, 0.0
        %v2260 = vmax.f32 %v2228, 0.0
        %v2261 = vmax.f32 %v2229, 0.0
        %v2262 = vmax.f32 %v2230, 0.0
        %v2263 = vmax.f32 %v2231, 0.0
        %v2264 = vmax.f32 %v2232, 0.0
        %v2265 = vmax.f32 %v2233, 0.0
        %v2266 = vmax.f32 %v2234, 0.0
        %v2267 = vmax.f32 %v2235, 0.0
        %v2268 = vmax.f32 %v2236, 0.0
        %v2269 = vmax.f32 %v2237, 0.0
        %v2270 = vmax.f32 %v2238, 0.0
        %v2271 = vmax.f32 %v2239, 0.0
        %v2272 = vmax.f32 %v2240, 0.0
        %v2273 = vmax.f32 %v2241, 0.0
        %v2274 = vmax.f32 %v2242, 0.0
        %v2275 = vmax.f32 %v2243, 0.0
        %v2276 = vmax.f32 %v2244, 0.0
        %v2277 = vmax.f32 %v2245, 0.0
        %v2278 = vmax.f32 %v2246, 0.0
        %v2279 = vmax.f32 %v2247, 0.0
        %v2280 = vmax.f32 %v2248, 0.0
        %v2281 = vmax.f32 %v2249, 0.0
        %v2282 = vmax.f32 %v2250, 0.0
        %v2283 = vmax.f32 %v2251, 0.0
        %2284 = vst [vmem:[%s299] sm:$0xff] %v2252
        %2285 = vst [vmem:[%s299 + $0x8] sm:$0xff] %v2253
        %2286 = vst [vmem:[%s299 + $0x10] sm:$0xff] %v2254
        %2287 = vst [vmem:[%s299 + $0x18] sm:$0xff] %v2255
        %2288 = vst [vmem:[%s299 + $0x20] sm:$0xff] %v2256
        %2289 = vst [vmem:[%s299 + $0x28] sm:$0xff] %v2257
        %2290 = vst [vmem:[%s299 + $0x30] sm:$0xff] %v2258
        %2291 = vst [vmem:[%s299 + $0x38] sm:$0xff] %v2259
        %2292 = vst [vmem:[%s299 + $0x40] sm:$0xff] %v2260
        %2293 = vst [vmem:[%s299 + $0x48] sm:$0xff] %v2261
        %2294 = vst [vmem:[%s299 + $0x50] sm:$0xff] %v2262
        %2295 = vst [vmem:[%s299 + $0x58] sm:$0xff] %v2263
        %2296 = vst [vmem:[%s299 + $0x60] sm:$0xff] %v2264
        %2297 = vst [vmem:[%s299 + $0x68] sm:$0xff] %v2265
        %2298 = vst [vmem:[%s299 + $0x70] sm:$0xff] %v2266
        %2299 = vst [vmem:[%s299 + $0x78] sm:$0xff] %v2267
        %2300 = vst [vmem:[%s299 + $0x80] sm:$0xff] %v2268
        %2301 = vst [vmem:[%s299 + $0x88] sm:$0xff] %v2269
        %2302 = vst [vmem:[%s299 + $0x90] sm:$0xff] %v2270
        %2303 = vst [vmem:[%s299 + $0x98] sm:$0xff] %v2271
        %2304 = vst [vmem:[%s299 + $0xa0] sm:$0xff] %v2272
        %2305 = vst [vmem:[%s299 + $0xa8] sm:$0xff] %v2273
        %2306 = vst [vmem:[%s299 + $0xb0] sm:$0xff] %v2274
        %2307 = vst [vmem:[%s299 + $0xb8] sm:$0xff] %v2275
        %2308 = vst [vmem:[%s299 + $0xc0] sm:$0xff] %v2276
        %2309 = vst [vmem:[%s299 + $0xc8] sm:$0xff] %v2277
        %2310 = vst [vmem:[%s299 + $0xd0] sm:$0xff] %v2278
        %2311 = vst [vmem:[%s299 + $0xd8] sm:$0xff] %v2279
        %2312 = vst [vmem:[%s299 + $0xe0] sm:$0xff] %v2280
        %2313 = vst [vmem:[%s299 + $0xe8] sm:$0xff] %v2281
        %2314 = vst [vmem:[%s299 + $0xf0] sm:$0xff] %v2282
        %2315 = vst [vmem:[%s299 + $0xf8] sm:$0xff] %v2283
        %s2316 = sand.u32 %s168, 1
        %s2317 = scalar_lea.sflag [#allocation6], %s2316
        %s2318 = sand.u32 %s168, 1
        %s2319 = smul.addr %s2318, 256
        %s2320 = scalar_lea.vmem [#allocation9], %s2319
        // Predicated region
        $region60: #{tpu_custom_call.1} parent=43 // pred_check
          %p2321 = pneg %p178
        $region61: #{tpu_custom_call.1} parent=43 // pred_check_branch
          %2323 = sbr.rel (%p2321) target = $region63
        $region62: #{tpu_custom_call.1} parent=43 // pred_region
          %s2325 = ssub.s32 4096, 4096
          %2326 = vsyncadd %s2317, %s2325
          %s2327 = smul.addr %s24, 32
          %s2328 = smul.addr %s2327, 128
          %s2329 = scalar_lea.hbm %s6, %s2328
          %s2330 = sshll.u32 %s2320, 4
          %s2331 = int_to_ptr.vmem [resolvable:$true] %s2330
          %2336 = dma.vmem_to_hbm [thread:$0]  %s2331, 4096, %s2329, %s2317, 256, 256, 16
        $region63: #{tpu_custom_call.1} parent=43 // pred_fallthru
          _
      $region44: #{tpu_custom_call.1} parent=5 // pred_fallthru
        _
      %p2337 = scmp.le.s32.totalorder 2, %s19
      // Predicated region
      $region64: #{tpu_custom_call.1} parent=5 // pred_check
        %p2338 = pneg %p2337
      $region65: #{tpu_custom_call.1} parent=5 // pred_check_branch
        %2340 = sbr.rel (%p2338) target = $region67
      $region66: #{tpu_custom_call.1} parent=5 // pred_region
        %s2341 = ssub.s32 %s19, 2
        // Predicated region
        $region68: #{tpu_custom_call.1} parent=66 // pred_check
          %p2342 = pneg %p184
        $region69: #{tpu_custom_call.1} parent=66 // pred_check_branch
          %2344 = sbr.rel (%p2342) target = $region71
        $region70: #{tpu_custom_call.1} parent=66 // pred_region
          %s2345 = sand.u32 %s169, 1
          %s2346 = scalar_lea.sflag [#allocation6], %s2345
          %s2347 = sand.u32 %s169, 1
          %s2348 = smul.addr %s2347, 256
          %s2349 = scalar_lea.vmem [#allocation9], %s2348
          %2350 = dma.done %s2346, 4096
        $region71: #{tpu_custom_call.1} parent=66 // pred_fallthru
          _
      $region67: #{tpu_custom_call.1} parent=5 // pred_fallthru
        _
    $region6: #{tpu_custom_call.1} parent=1 // loop_footer
      %s23 = sadd.s32 1, %s19
    $region7: #{tpu_custom_call.1} parent=1 // loop_footer_branch
      %18 = sbr.rel target = $region3
    $region8: #{tpu_custom_call.1} parent=1 // loop_exit
      _
    %2351 = vsyncpa [#allocation5], 1
    %s2352 = scalar_lea.sflag [#allocation5], 1
    %2353 = vsyncpa %s2352, 1
    %2354 = vsyncpa [#allocation8], 1
    %2355 = vsyncpa [#allocation6], 1
    %s2356 = scalar_lea.sflag [#allocation6], 1
    %2357 = vsyncpa %s2356, 1

</llo_original>
